<compile_context>
chip_gen: v7x
topology: tpu7x:2x2x1
jax: 0.10.0
libtpu: 0.0.40
codegen_flags: <defaults>
</compile_context>

<pallas_src>
import functools
import math

import jax
import jax.numpy as jnp
from jax import lax
from jax.experimental import pallas as pl
from jax.experimental.pallas import tpu as pltpu


def _round_up(x, m):
    return ((x + m - 1) // m) * m


def _pad_dims(K, cout):
    """Padded K / N extents and tile sizes (lane-dense, MXU-friendly)."""
    Kp = _round_up(K, 128)
    tk = Kp if Kp <= 1024 else 512          # single K tile when it fits -> B resident
    Kp = _round_up(Kp, tk)
    Np = _round_up(cout, 128)
    tn = Np if Np <= 512 else 256
    Np = _round_up(Np, tn)
    return Kp, tk, Np, tn


def _m_tiling(M):
    """M tile (multiple of 16, <= 512) and padded extent."""
    mt = -(-M // 512)                       # number of M tiles
    tm = _round_up(-(-M // mt), 16)
    return tm, tm * mt


# ----------------------------- Pallas kernels ------------------------------

def _matmul_stats_kernel(a_ref, b_ref, o_ref, sum_ref, sq_ref, acc_ref):
    """bf16 matmul, f32 accumulation, fused per-column partial sum / sum-of-sq.

    grid = (N_tiles, M_tiles, K_tiles); K innermost ("arbitrary"), N and M
    "parallel" (megacore-shardable): each (i, j) writes its own stats block.
    """
    k = pl.program_id(2)
    nk = pl.num_programs(2)

    @pl.when(k == 0)
    def _():
        acc_ref[...] = jnp.zeros_like(acc_ref)

    acc_ref[...] += jnp.dot(a_ref[...], b_ref[...],
                            preferred_element_type=jnp.float32)

    @pl.when(k == nk - 1)
    def _():
        t = acc_ref[...]
        o_ref[...] = t.astype(o_ref.dtype)                    # bf16 intermediate
        sum_ref[...] = jnp.sum(t, axis=0, keepdims=True)      # per-M-tile partials
        sq_ref[...] = jnp.sum(t * t, axis=0, keepdims=True)


def _bn_act_kernel(x_ref, scale_ref, shift_ref, o_ref, *, slope):
    z = x_ref[...].astype(jnp.float32) * scale_ref[...] + shift_ref[...]
    # leaky_relu with 0 < slope < 1  ==  max(z, slope*z)
    o_ref[...] = jnp.maximum(z, slope * z).astype(o_ref.dtype)


def _conv_matmul_stats(a_p, w_p, tm, tk, tn):
    Mp, Kp = a_p.shape
    _, Np = w_p.shape
    mt, nt, kt = Mp // tm, Np // tn, Kp // tk
    grid = (nt, mt, kt)
    return pl.pallas_call(
        _matmul_stats_kernel,
        out_shape=(jax.ShapeDtypeStruct((Mp, Np), jnp.bfloat16),
                   jax.ShapeDtypeStruct((mt, Np), jnp.float32),
                   jax.ShapeDtypeStruct((mt, Np), jnp.float32)),
        grid_spec=pltpu.PrefetchScalarGridSpec(
            num_scalar_prefetch=0,
            grid=grid,
            in_specs=[
                pl.BlockSpec((tm, tk), lambda j, i, k: (i, k)),
                # For kt == 1 this block index is constant across i -> weight
                # tile stays resident in VMEM for the whole N column.
                pl.BlockSpec((tk, tn), lambda j, i, k: (k, j)),
            ],
            out_specs=(
                pl.BlockSpec((tm, tn), lambda j, i, k: (i, j)),
                pl.BlockSpec((1, tn), lambda j, i, k: (i, j)),
                pl.BlockSpec((1, tn), lambda j, i, k: (i, j)),
            ),
            scratch_shapes=[pltpu.VMEM((tm, tn), jnp.float32)],
        ),
        compiler_params=pltpu.CompilerParams(
            dimension_semantics=("parallel", "parallel", "arbitrary"),
            vmem_limit_bytes=32 * 1024 * 1024),
    )(a_p, w_p)


def _bn_leaky_relu(x_p, scale, shift, tm, slope):
    Mp, Np = x_p.shape
    grid = (Mp // tm,)
    return pl.pallas_call(
        functools.partial(_bn_act_kernel, slope=slope),
        out_shape=jax.ShapeDtypeStruct((Mp, Np), jnp.float32),
        grid_spec=pltpu.PrefetchScalarGridSpec(
            num_scalar_prefetch=0,
            grid=grid,
            in_specs=[
                pl.BlockSpec((tm, Np), lambda i: (i, 0)),     # full-width, lane-dense
                pl.BlockSpec((1, Np), lambda i: (0, 0)),
                pl.BlockSpec((1, Np), lambda i: (0, 0)),
            ],
            out_specs=pl.BlockSpec((tm, Np), lambda i: (i, 0)),
        ),
        compiler_params=pltpu.CompilerParams(
            dimension_semantics=("parallel",),
            vmem_limit_bytes=32 * 1024 * 1024),
    )(x_p, scale, shift)


# ------------------------------- glue + forward ------------------------------

def _im2col_padded_bf16(x_nhwc_bf16, kh, kw, stride, padding, Mp, Kp):
    """(N,H,W,C) bf16 -> zero-padded (Mp, Kp) patch matrix (tap-major, chan-minor)."""
    x = x_nhwc_bf16
    if padding > 0:
        x = jnp.pad(x, ((0, 0), (padding, padding), (padding, padding), (0, 0)))
    n, hp, wp, c = x.shape
    ho = (hp - kh) // stride + 1
    wo = (wp - kw) // stride + 1
    cols = [x[:, i:i + (ho - 1) * stride + 1:stride,
              j:j + (wo - 1) * stride + 1:stride, :]
            for i in range(kh) for j in range(kw)]
    patches = jnp.stack(cols, axis=3)                 # (n, ho, wo, kh*kw, c)
    a = patches.reshape(n * ho * wo, kh * kw * c)
    M, K = a.shape
    a_p = jnp.pad(a, ((0, Mp - M), (0, Kp - K)))      # single fused pad (bf16)
    return a_p, (n, ho, wo, M)


@functools.partial(jax.jit, static_argnums=(4,))
def _forward(x_nchw, w_p, gamma_p, beta_p, cfg):
    (kh, kw, stride, padding, cout, K, Kp, tk, Np, tn, eps, slope) = cfg

    x = jnp.transpose(x_nchw.astype(jnp.bfloat16), (0, 2, 3, 1))     # NHWC bf16
    n, h, w, _ = x.shape
    ho = (h + 2 * padding - kh) // stride + 1
    wo = (w + 2 * padding - kw) // stride + 1
    M = n * ho * wo
    tm, Mp = _m_tiling(M)

    a_p, _ = _im2col_padded_bf16(x, kh, kw, stride, padding, Mp, Kp)

    conv_p, psum, psq = _conv_matmul_stats(a_p, w_p, tm, tk, tn)

    # Batch statistics (biased variance, PyTorch training mode).  Zero-padded
    # rows/cols contribute zero to the partial sums, so dividing by the true M
    # is exact.  Tiny (Mt, Np) reduction stays in XLA.
    inv_m = 1.0 / float(M)
    mean = jnp.sum(psum, axis=0, keepdims=True) * inv_m
    var = jnp.maximum(jnp.sum(psq, axis=0, keepdims=True) * inv_m - mean * mean, 0.0)
    scale = gamma_p * lax.rsqrt(var + eps)
    shift = beta_p - mean * scale

    # Elementwise pass: full-width tiles, rows up to 1024.
    tm_e = tm
    while tm_e * 2 <= 1024 and Mp % (tm_e * 2) == 0:
        tm_e *= 2
    y_p = _bn_leaky_relu(conv_p, scale, shift, tm_e, slope)

    y = y_p[:M, :cout].reshape(n, ho, wo, cout)
    return jnp.transpose(y, (0, 3, 1, 2))                             # NCHW


# --------------------------------- module -----------------------------------

class ConvBN:
    """Pallas TPU implementation of ConvBN.forward (training-mode BatchNorm)."""

    def __init__(self, key, ch_in, ch_out, kernel_size=3, stride=1, padding=0):
        self.kh = self.kw = kernel_size
        self.cin, self.cout = ch_in, ch_out
        self.stride, self.padding = stride, padding
        self.eps = 1e-5
        self.negative_slope = 0.1

        # PyTorch Conv2d default init: kaiming_uniform(a=sqrt(5)) -> U(-b, b)
        fan_in = ch_in * kernel_size * kernel_size
        bound = 1.0 / math.sqrt(fan_in)
        self.w = jax.random.uniform(key, (self.kh, self.kw, ch_in, ch_out),
                                    jnp.float32, -bound, bound)   # HWIO
        self.gamma = jnp.ones((ch_out,), jnp.float32)
        self.beta = jnp.zeros((ch_out,), jnp.float32)

        # One-time padding of weights / affine params to lane multiples.
        self.K = self.kh * self.kw * ch_in
        self.Kp, self.tk, self.Np, self.tn = _pad_dims(self.K, ch_out)
        w2 = self.w.reshape(self.K, ch_out).astype(jnp.bfloat16)
        self.w_p = jnp.zeros((self.Kp, self.Np), jnp.bfloat16).at[
            :self.K, :ch_out].set(w2)
        self.gamma_p = jnp.zeros((1, self.Np), jnp.float32).at[
            0, :ch_out].set(self.gamma)
        self.beta_p = jnp.zeros((1, self.Np), jnp.float32).at[
            0, :ch_out].set(self.beta)

        self._cfg = (self.kh, self.kw, stride, padding, ch_out, self.K,
                     self.Kp, self.tk, self.Np, self.tn,
                     self.eps, self.negative_slope)

    def __call__(self, x_nchw):
        return _forward(x_nchw, self.w_p, self.gamma_p, self.beta_p, self._cfg)


# -------------------------------- reference ----------------------------------

def _reference_convbn(x_nchw, w_hwio, gamma, beta, *, stride, padding, eps,
                      negative_slope):
    w_oihw = jnp.transpose(w_hwio, (3, 2, 0, 1))
    y = jax.lax.conv_general_dilated(
        x_nchw, w_oihw, window_strides=(stride, stride),
        padding=[(padding, padding), (padding, padding)],
        dimension_numbers=("NCHW", "OIHW", "NCHW"))
    mean = jnp.mean(y, axis=(0, 2, 3), keepdims=True)
    var = jnp.mean((y - mean) ** 2, axis=(0, 2, 3), keepdims=True)
    z = gamma.reshape(1, -1, 1, 1) * (y - mean) * jax.lax.rsqrt(var + eps) \
        + beta.reshape(1, -1, 1, 1)
    return jnp.where(z >= 0, z, negative_slope * z)


# ----------------------------------- main ------------------------------------

if __name__ == "__main__":
    key = jax.random.PRNGKey(0)
    k_x, k_w = jax.random.split(key)

    # ConvBN(ch_in=4, ch_out=8) at batch=2, 16x16 spatial (module defaults:
    # kernel_size=3, stride=1, padding=0).
    x = jax.random.normal(k_x, (2, 3, 16, 16), jnp.float32)
    x = jnp.concatenate([x, x[:, :1]], axis=1)   # -> (2, 4, 16, 16), deterministic

    layer = ConvBN(k_w, ch_in=4, ch_out=8, kernel_size=3, stride=1, padding=0)
    out = layer(x)
    out = jax.block_until_ready(out)
    assert out.shape == (2, 8, 14, 14), out.shape

    ref = _reference_convbn(x, layer.w, layer.gamma, layer.beta,
                            stride=layer.stride, padding=layer.padding,
                            eps=layer.eps,
                            negative_slope=layer.negative_slope)
    err = float(jnp.max(jnp.abs(out - ref)))
    assert err < 5e-2, f"max abs error vs reference: {err}"

    print("KERNEL_OK")
</pallas_src>

<mosaic_0001>
module attributes {stable_mosaic.version = 11 : i64} {
  func.func @_matmul_stats_kernel(%arg0: i32, %arg1: i32, %arg2: i32, %arg3: memref<400x128xbf16, #tpu.memory_space<vmem>>, %arg4: memref<128x128xbf16, #tpu.memory_space<vmem>>, %arg5: memref<400x128xbf16, #tpu.memory_space<vmem>>, %arg6: memref<1x128xf32, #tpu.memory_space<vmem>>, %arg7: memref<1x128xf32, #tpu.memory_space<vmem>>, %arg8: memref<400x128xf32, #tpu.memory_space<vmem>>) attributes {dimension_semantics = [#tpu.dimension_semantics<parallel>, #tpu.dimension_semantics<parallel>, #tpu.dimension_semantics<arbitrary>], iteration_bounds = array<i64: 1, 1, 1>, scalar_prefetch = 0 : i64, scratch_operands = 1 : i64, tpu.core_type = #tpu.core_type<tc>, window_params = [{transform_indices = @transform_0, window_bounds = array<i64: 400, 128>}, {transform_indices = @transform_1, window_bounds = array<i64: 128, 128>}, {transform_indices = @transform_2, window_bounds = array<i64: 400, 128>}, {transform_indices = @transform_3, window_bounds = array<i64: 1, 128>}, {transform_indices = @transform_4, window_bounds = array<i64: 1, 128>}]} {
    %c0_i32 = arith.constant 0 : i32
    %0 = arith.cmpi eq, %arg2, %c0_i32 : i32
    %1 = arith.extui %0 : i1 to i32
    %c0_i32_0 = arith.constant 0 : i32
    %2 = arith.cmpi ne, %1, %c0_i32_0 : i32
    scf.if %2 {
      %cst_10 = arith.constant 0.000000e+00 : f32
      %12 = vector.broadcast %cst_10 : f32 to vector<400x128xf32>
      %c0_11 = arith.constant 0 : index
      %c0_12 = arith.constant 0 : index
      %13 = vector.load %arg8[%c0_11, %c0_12] : memref<400x128xf32, #tpu.memory_space<vmem>>, vector<400x128xf32>
      tpu.vector_store %arg8[%c0_11, %c0_12], %12 {strides = array<i32>} : memref<400x128xf32, #tpu.memory_space<vmem>>, vector<400x128xf32>,
    } else {
    }
    %c0 = arith.constant 0 : index
    %c0_1 = arith.constant 0 : index
    %3 = vector.load %arg8[%c0, %c0_1] : memref<400x128xf32, #tpu.memory_space<vmem>>, vector<400x128xf32>
    %c0_2 = arith.constant 0 : index
    %c0_3 = arith.constant 0 : index
    %4 = vector.load %arg3[%c0_2, %c0_3] : memref<400x128xbf16, #tpu.memory_space<vmem>>, vector<400x128xbf16>
    %c0_4 = arith.constant 0 : index
    %c0_5 = arith.constant 0 : index
    %5 = vector.load %arg4[%c0_4, %c0_5] : memref<128x128xbf16, #tpu.memory_space<vmem>>, vector<128x128xbf16>
    %cst = arith.constant dense<0.000000e+00> : vector<400x128xf32>
    %6 = tpu.matmul %4, %5, %cst {dimension_numbers = #tpu.dot_dimension_numbers<[1], [0], [0], [1], [0, 0, 1, 1], [], []>} : vector<400x128xbf16>, vector<128x128xbf16>, vector<400x128xf32> -> vector<400x128xf32>
    %7 = arith.addf %3, %6 : vector<400x128xf32>
    %c0_6 = arith.constant 0 : index
    %c0_7 = arith.constant 0 : index
    %8 = vector.load %arg8[%c0_6, %c0_7] : memref<400x128xf32, #tpu.memory_space<vmem>>, vector<400x128xf32>
    tpu.vector_store %arg8[%c0_6, %c0_7], %7 {strides = array<i32>} : memref<400x128xf32, #tpu.memory_space<vmem>>, vector<400x128xf32>,
    %c0_i32_8 = arith.constant 0 : i32
    %9 = arith.cmpi eq, %arg2, %c0_i32_8 : i32
    %10 = arith.extui %9 : i1 to i32
    %c0_i32_9 = arith.constant 0 : i32
    %11 = arith.cmpi ne, %10, %c0_i32_9 : i32
    scf.if %11 {
      %c0_10 = arith.constant 0 : index
      %c0_11 = arith.constant 0 : index
      %12 = vector.load %arg8[%c0_10, %c0_11] : memref<400x128xf32, #tpu.memory_space<vmem>>, vector<400x128xf32>
      %13 = arith.truncf %12 : vector<400x128xf32> to vector<400x128xbf16>
      %c0_12 = arith.constant 0 : index
      %c0_13 = arith.constant 0 : index
      %14 = vector.load %arg5[%c0_12, %c0_13] : memref<400x128xbf16, #tpu.memory_space<vmem>>, vector<400x128xbf16>
      tpu.vector_store %arg5[%c0_12, %c0_13], %13 {strides = array<i32>} : memref<400x128xbf16, #tpu.memory_space<vmem>>, vector<400x128xbf16>,
      %cst_14 = arith.constant dense<0.000000e+00> : vector<128xf32>
      %15 = vector.multi_reduction <add>, %12, %cst_14 [0] : vector<400x128xf32> to vector<128xf32>
      %16 = vector.shape_cast %15 : vector<128xf32> to vector<1x128xf32>
      %c0_15 = arith.constant 0 : index
      %c0_16 = arith.constant 0 : index
      %17 = vector.load %arg6[%c0_15, %c0_16] : memref<1x128xf32, #tpu.memory_space<vmem>>, vector<1x128xf32>
      tpu.vector_store %arg6[%c0_15, %c0_16], %16 {strides = array<i32>} : memref<1x128xf32, #tpu.memory_space<vmem>>, vector<1x128xf32>,
      %18 = arith.mulf %12, %12 : vector<400x128xf32>
      %cst_17 = arith.constant dense<0.000000e+00> : vector<128xf32>
      %19 = vector.multi_reduction <add>, %18, %cst_17 [0] : vector<400x128xf32> to vector<128xf32>
      %20 = vector.shape_cast %19 : vector<128xf32> to vector<1x128xf32>
      %c0_18 = arith.constant 0 : index
      %c0_19 = arith.constant 0 : index
      %21 = vector.load %arg7[%c0_18, %c0_19] : memref<1x128xf32, #tpu.memory_space<vmem>>, vector<1x128xf32>
      tpu.vector_store %arg7[%c0_18, %c0_19], %20 {strides = array<i32>} : memref<1x128xf32, #tpu.memory_space<vmem>>, vector<1x128xf32>,
    } else {
    }
    return
  }
  func.func @transform_0(%arg0: i32, %arg1: i32, %arg2: i32) -> (i32, i32) {
    %c0_i32 = arith.constant 0 : i32
    return %arg1, %arg2 : i32, i32
  }
  func.func @transform_1(%arg0: i32, %arg1: i32, %arg2: i32) -> (i32, i32) {
    %c0_i32 = arith.constant 0 : i32
    return %arg2, %arg0 : i32, i32
  }
  func.func @transform_2(%arg0: i32, %arg1: i32, %arg2: i32) -> (i32, i32) {
    %c0_i32 = arith.constant 0 : i32
    return %arg1, %arg0 : i32, i32
  }
  func.func @transform_3(%arg0: i32, %arg1: i32, %arg2: i32) -> (i32, i32) {
    %c0_i32 = arith.constant 0 : i32
    return %arg1, %arg0 : i32, i32
  }
  func.func @transform_4(%arg0: i32, %arg1: i32, %arg2: i32) -> (i32, i32) {
    %c0_i32 = arith.constant 0 : i32
    return %arg1, %arg0 : i32, i32
  }
}

module attributes {stable_mosaic.version = 11 : i64} {
  func.func @_bn_act_kernel(%arg0: i32, %arg1: memref<400x128xbf16, #tpu.memory_space<vmem>>, %arg2: memref<1x128xf32, #tpu.memory_space<vmem>>, %arg3: memref<1x128xf32, #tpu.memory_space<vmem>>, %arg4: memref<400x128xf32, #tpu.memory_space<vmem>>) attributes {dimension_semantics = [#tpu.dimension_semantics<parallel>], iteration_bounds = array<i64: 1>, scalar_prefetch = 0 : i64, scratch_operands = 0 : i64, tpu.core_type = #tpu.core_type<tc>, window_params = [{transform_indices = @transform_0, window_bounds = array<i64: 400, 128>}, {pipeline_mode = #tpu.pipeline_mode<synchronous>, transform_indices = @transform_1, window_bounds = array<i64: 1, 128>}, {pipeline_mode = #tpu.pipeline_mode<synchronous>, transform_indices = @transform_2, window_bounds = array<i64: 1, 128>}, {transform_indices = @transform_3, window_bounds = array<i64: 400, 128>}]} {
    %c0 = arith.constant 0 : index
    %c0_0 = arith.constant 0 : index
    %0 = vector.load %arg1[%c0, %c0_0] : memref<400x128xbf16, #tpu.memory_space<vmem>>, vector<400x128xbf16>
    %1 = arith.extf %0 : vector<400x128xbf16> to vector<400x128xf32>
    %c0_1 = arith.constant 0 : index
    %c0_2 = arith.constant 0 : index
    %2 = vector.load %arg2[%c0_1, %c0_2] : memref<1x128xf32, #tpu.memory_space<vmem>>, vector<1x128xf32>
    %3 = vector.broadcast %2 : vector<1x128xf32> to vector<400x128xf32>
    %4 = arith.mulf %1, %3 : vector<400x128xf32>
    %c0_3 = arith.constant 0 : index
    %c0_4 = arith.constant 0 : index
    %5 = vector.load %arg3[%c0_3, %c0_4] : memref<1x128xf32, #tpu.memory_space<vmem>>, vector<1x128xf32>
    %6 = vector.broadcast %5 : vector<1x128xf32> to vector<400x128xf32>
    %7 = arith.addf %4, %6 : vector<400x128xf32>
    %cst = arith.constant 1.000000e-01 : f32
    %8 = vector.broadcast %cst : f32 to vector<400x128xf32>
    %9 = arith.mulf %8, %7 : vector<400x128xf32>
    %10 = arith.maximumf %7, %9 : vector<400x128xf32>
    %c0_5 = arith.constant 0 : index
    %c0_6 = arith.constant 0 : index
    %11 = vector.load %arg4[%c0_5, %c0_6] : memref<400x128xf32, #tpu.memory_space<vmem>>, vector<400x128xf32>
    tpu.vector_store %arg4[%c0_5, %c0_6], %10 {strides = array<i32>} : memref<400x128xf32, #tpu.memory_space<vmem>>, vector<400x128xf32>,
    return
  }
  func.func @transform_0(%arg0: i32) -> (i32, i32) {
    %c0_i32 = arith.constant 0 : i32
    %c0_i32_0 = arith.constant 0 : i32
    return %arg0, %c0_i32 : i32, i32
  }
  func.func @transform_1(%arg0: i32) -> (i32, i32) {
    %c0_i32 = arith.constant 0 : i32
    %c0_i32_0 = arith.constant 0 : i32
    %c0_i32_1 = arith.constant 0 : i32
    return %c0_i32, %c0_i32_0 : i32, i32
  }
  func.func @transform_2(%arg0: i32) -> (i32, i32) {
    %c0_i32 = arith.constant 0 : i32
    %c0_i32_0 = arith.constant 0 : i32
    %c0_i32_1 = arith.constant 0 : i32
    return %c0_i32, %c0_i32_0 : i32, i32
  }
  func.func @transform_3(%arg0: i32) -> (i32, i32) {
    %c0_i32 = arith.constant 0 : i32
    %c0_i32_0 = arith.constant 0 : i32
    return %arg0, %c0_i32 : i32, i32
  }
}

</mosaic_0001>

<llo_original>
// kernel: _forward.3
$region0: #{_forward.3}
  #allocation0 [shape = 'u32[]', space=smem, size = 0x4, offset = 0x4, fixed_abs, tag = 'smem constant byte address 0x4 - core index']
  #allocation1 [shape = 'u32[144,128]{1,0:T(1,128)}', space=vmem, size = 0x12000, scoped, tag = 'internal scratch']
  %s0 = inlined_call_operand.vmem [shape: bf16[400,128], index: 0, kind: input, shape index: {}]
  %s1 = inlined_call_operand.vmem [shape: f32[1,128], index: 1, kind: input, shape index: {}]
  %s2 = inlined_call_operand.vmem [shape: f32[1,128], index: 2, kind: input, shape index: {}]
  %s3 = inlined_call_operand.vmem [shape: f32[400,128], index: 3, kind: output, shape index: {}]
  %s4 = sld [smem:[#allocation0]]
  $region22: #{_forward.3} parent=0
    _
  %s6 = ssub.s32 1, %s4
  %s7 = scalar_select 0, %s6, %s4
  // Predicated region
  $region2: #{_forward.3} parent=0 // pred_check
    _
  $region3: #{_forward.3} parent=0 // pred_check_branch
    %9 = sbr.rel (0) target = $region5
  $region4: #{_forward.3} parent=0 // pred_region
    _
  $region5: #{_forward.3} parent=0 // pred_fallthru
    _
  // Predicated region
  $region6: #{_forward.3} parent=0 // pred_check
    _
  $region7: #{_forward.3} parent=0 // pred_check_branch
    %11 = sbr.rel (0) target = $region9
  $region8: #{_forward.3} parent=0 // pred_region
    _
  $region9: #{_forward.3} parent=0 // pred_fallthru
    _
  // Predicated region
  $region10: #{_forward.3} parent=0 // pred_check
    _
  $region11: #{_forward.3} parent=0 // pred_check_branch
    %13 = sbr.rel (0) target = $region13
  $region12: #{_forward.3} parent=0 // pred_region
    _
  $region13: #{_forward.3} parent=0 // pred_fallthru
    _
  %v14 = vld [vmem:[%s0] sm:$0xf]
  %v15 = vld [vmem:[%s0 + $0x4] sm:$0xf]
  %v16 = vld [vmem:[%s0 + $0x8] sm:$0xf]
  %v17 = vld [vmem:[%s0 + $0xc] sm:$0xf]
  %v18 = vld [vmem:[%s0 + $0x10] sm:$0xf]
  %v19 = vld [vmem:[%s0 + $0x14] sm:$0xf]
  %v20 = vld [vmem:[%s0 + $0x18] sm:$0xf]
  %v21 = vld [vmem:[%s0 + $0x1c] sm:$0xf]
  %v22 = vld [vmem:[%s0 + $0x20] sm:$0xf]
  %v23 = vld [vmem:[%s0 + $0x24] sm:$0xf]
  %v24 = vld [vmem:[%s0 + $0x28] sm:$0xf]
  %v25 = vld [vmem:[%s0 + $0x2c] sm:$0xf]
  %v26 = vld [vmem:[%s0 + $0x30] sm:$0xf]
  %v27 = vld [vmem:[%s0 + $0x34] sm:$0xf]
  %v28 = vld [vmem:[%s0 + $0x38] sm:$0xf]
  %v29 = vld [vmem:[%s0 + $0x3c] sm:$0xf]
  %v30 = vld [vmem:[%s0 + $0x40] sm:$0xf]
  %v31 = vld [vmem:[%s0 + $0x44] sm:$0xf]
  %v32 = vld [vmem:[%s0 + $0x48] sm:$0xf]
  %v33 = vld [vmem:[%s0 + $0x4c] sm:$0xf]
  %v34 = vld [vmem:[%s0 + $0x50] sm:$0xf]
  %v35 = vld [vmem:[%s0 + $0x54] sm:$0xf]
  %v36 = vld [vmem:[%s0 + $0x58] sm:$0xf]
  %v37 = vld [vmem:[%s0 + $0x5c] sm:$0xf]
  %v38 = vld [vmem:[%s0 + $0x60] sm:$0xf]
  %v39 = vld [vmem:[%s0 + $0x64] sm:$0xf]
  %v40 = vld [vmem:[%s0 + $0x68] sm:$0xf]
  %v41 = vld [vmem:[%s0 + $0x6c] sm:$0xf]
  %v42 = vld [vmem:[%s0 + $0x70] sm:$0xf]
  %v43 = vld [vmem:[%s0 + $0x74] sm:$0xf]
  %v44 = vld [vmem:[%s0 + $0x78] sm:$0xf]
  %v45 = vld [vmem:[%s0 + $0x7c] sm:$0xf]
  %v46 = vld [vmem:[%s0 + $0x80] sm:$0xf]
  %v47 = vld [vmem:[%s0 + $0x84] sm:$0xf]
  %v48 = vld [vmem:[%s0 + $0x88] sm:$0xf]
  %v49 = vld [vmem:[%s0 + $0x8c] sm:$0xf]
  %v50 = vld [vmem:[%s0 + $0x90] sm:$0xf]
  %v51 = vld [vmem:[%s0 + $0x94] sm:$0xf]
  %v52 = vld [vmem:[%s0 + $0x98] sm:$0xf]
  %v53 = vld [vmem:[%s0 + $0x9c] sm:$0xf]
  %v54 = vld [vmem:[%s0 + $0xa0] sm:$0xf]
  %v55 = vld [vmem:[%s0 + $0xa4] sm:$0xf]
  %v56 = vld [vmem:[%s0 + $0xa8] sm:$0xf]
  %v57 = vld [vmem:[%s0 + $0xac] sm:$0xf]
  %v58 = vld [vmem:[%s0 + $0xb0] sm:$0xf]
  %v59 = vld [vmem:[%s0 + $0xb4] sm:$0xf]
  %v60 = vld [vmem:[%s0 + $0xb8] sm:$0xf]
  %v61 = vld [vmem:[%s0 + $0xbc] sm:$0xf]
  %v62 = vld [vmem:[%s0 + $0xc0] sm:$0xf]
  %v63 = vld [vmem:[%s0 + $0xc4] sm:$0xf]
  %v64 = vunpack.c.l.bf16 %v14
  %v65 = vunpack.c.l.bf16 %v15
  %v66 = vunpack.c.l.bf16 %v16
  %v67 = vunpack.c.l.bf16 %v17
  %v68 = vunpack.c.l.bf16 %v18
  %v69 = vunpack.c.l.bf16 %v19
  %v70 = vunpack.c.l.bf16 %v20
  %v71 = vunpack.c.l.bf16 %v21
  %v72 = vunpack.c.l.bf16 %v22
  %v73 = vunpack.c.l.bf16 %v23
  %v74 = vunpack.c.l.bf16 %v24
  %v75 = vunpack.c.l.bf16 %v25
  %v76 = vunpack.c.l.bf16 %v26
  %v77 = vunpack.c.l.bf16 %v27
  %v78 = vunpack.c.l.bf16 %v28
  %v79 = vunpack.c.l.bf16 %v29
  %v80 = vunpack.c.l.bf16 %v30
  %v81 = vunpack.c.l.bf16 %v31
  %v82 = vunpack.c.l.bf16 %v32
  %v83 = vunpack.c.l.bf16 %v33
  %v84 = vunpack.c.l.bf16 %v34
  %v85 = vunpack.c.l.bf16 %v35
  %v86 = vunpack.c.l.bf16 %v36
  %v87 = vunpack.c.l.bf16 %v37
  %v88 = vunpack.c.l.bf16 %v38
  %v89 = vunpack.c.l.bf16 %v39
  %v90 = vunpack.c.l.bf16 %v40
  %v91 = vunpack.c.l.bf16 %v41
  %v92 = vunpack.c.l.bf16 %v42
  %v93 = vunpack.c.l.bf16 %v43
  %v94 = vunpack.c.l.bf16 %v44
  %v95 = vunpack.c.l.bf16 %v45
  %v96 = vunpack.c.l.bf16 %v46
  %v97 = vunpack.c.l.bf16 %v47
  %v98 = vunpack.c.l.bf16 %v48
  %v99 = vunpack.c.l.bf16 %v49
  %v100 = vunpack.c.l.bf16 %v50
  %v101 = vunpack.c.l.bf16 %v51
  %v102 = vunpack.c.l.bf16 %v52
  %v103 = vunpack.c.l.bf16 %v53
  %v104 = vunpack.c.l.bf16 %v54
  %v105 = vunpack.c.l.bf16 %v55
  %v106 = vunpack.c.l.bf16 %v56
  %v107 = vunpack.c.l.bf16 %v57
  %v108 = vunpack.c.l.bf16 %v58
  %v109 = vunpack.c.l.bf16 %v59
  %v110 = vunpack.c.l.bf16 %v60
  %v111 = vunpack.c.l.bf16 %v61
  %v112 = vunpack.c.l.bf16 %v62
  %v113 = vunpack.c.l.bf16 %v63
  %v114 = vld [vmem:[%s1] sm:$0x1]
  %v116 = vlaneseq
  %v117 = vshrl.u32 %v116, 7
  %v118 = vsub.s32 0, %v117
  %v119 = vrot.slane %v114, %v118
  %v121 = vmul.f32 %v64, %v119
  %v122 = vmul.f32 %v65, %v119
  %v123 = vmul.f32 %v66, %v119
  %v124 = vmul.f32 %v67, %v119
  %v125 = vmul.f32 %v68, %v119
  %v126 = vmul.f32 %v69, %v119
  %v127 = vmul.f32 %v70, %v119
  %v128 = vmul.f32 %v71, %v119
  %v129 = vmul.f32 %v72, %v119
  %v130 = vmul.f32 %v73, %v119
  %v131 = vmul.f32 %v74, %v119
  %v132 = vmul.f32 %v75, %v119
  %v133 = vmul.f32 %v76, %v119
  %v134 = vmul.f32 %v77, %v119
  %v135 = vmul.f32 %v78, %v119
  %v136 = vmul.f32 %v79, %v119
  %v137 = vmul.f32 %v80, %v119
  %v138 = vmul.f32 %v81, %v119
  %v139 = vmul.f32 %v82, %v119
  %v140 = vmul.f32 %v83, %v119
  %v141 = vmul.f32 %v84, %v119
  %v142 = vmul.f32 %v85, %v119
  %v143 = vmul.f32 %v86, %v119
  %v144 = vmul.f32 %v87, %v119
  %v145 = vmul.f32 %v88, %v119
  %v146 = vmul.f32 %v89, %v119
  %v147 = vmul.f32 %v90, %v119
  %v148 = vmul.f32 %v91, %v119
  %v149 = vmul.f32 %v92, %v119
  %v150 = vmul.f32 %v93, %v119
  %v151 = vmul.f32 %v94, %v119
  %v152 = vmul.f32 %v95, %v119
  %v153 = vmul.f32 %v96, %v119
  %v154 = vmul.f32 %v97, %v119
  %v155 = vmul.f32 %v98, %v119
  %v156 = vmul.f32 %v99, %v119
  %v157 = vmul.f32 %v100, %v119
  %v158 = vmul.f32 %v101, %v119
  %v159 = vmul.f32 %v102, %v119
  %v160 = vmul.f32 %v103, %v119
  %v161 = vmul.f32 %v104, %v119
  %v162 = vmul.f32 %v105, %v119
  %v163 = vmul.f32 %v106, %v119
  %v164 = vmul.f32 %v107, %v119
  %v165 = vmul.f32 %v108, %v119
  %v166 = vmul.f32 %v109, %v119
  %v167 = vmul.f32 %v110, %v119
  %v168 = vmul.f32 %v111, %v119
  %v169 = vmul.f32 %v112, %v119
  %v170 = vmul.f32 %v113, %v119
  %v171 = vld [vmem:[%s2] sm:$0x1]
  %v173 = vlaneseq
  %v174 = vshrl.u32 %v173, 7
  %v175 = vsub.s32 0, %v174
  %v176 = vrot.slane %v171, %v175
  %v178 = vadd.f32 %v121, %v176
  %v179 = vadd.f32 %v122, %v176
  %v180 = vadd.f32 %v123, %v176
  %v181 = vadd.f32 %v124, %v176
  %v182 = vadd.f32 %v125, %v176
  %v183 = vadd.f32 %v126, %v176
  %v184 = vadd.f32 %v127, %v176
  %v185 = vadd.f32 %v128, %v176
  %v186 = vadd.f32 %v129, %v176
  %v187 = vadd.f32 %v130, %v176
  %v188 = vadd.f32 %v131, %v176
  %v189 = vadd.f32 %v132, %v176
  %v190 = vadd.f32 %v133, %v176
  %v191 = vadd.f32 %v134, %v176
  %v192 = vadd.f32 %v135, %v176
  %v193 = vadd.f32 %v136, %v176
  %v194 = vadd.f32 %v137, %v176
  %v195 = vadd.f32 %v138, %v176
  %v196 = vadd.f32 %v139, %v176
  %v197 = vadd.f32 %v140, %v176
  %v198 = vadd.f32 %v141, %v176
  %v199 = vadd.f32 %v142, %v176
  %v200 = vadd.f32 %v143, %v176
  %v201 = vadd.f32 %v144, %v176
  %v202 = vadd.f32 %v145, %v176
  %v203 = vadd.f32 %v146, %v176
  %v204 = vadd.f32 %v147, %v176
  %v205 = vadd.f32 %v148, %v176
  %v206 = vadd.f32 %v149, %v176
  %v207 = vadd.f32 %v150, %v176
  %v208 = vadd.f32 %v151, %v176
  %v209 = vadd.f32 %v152, %v176
  %v210 = vadd.f32 %v153, %v176
  %v211 = vadd.f32 %v154, %v176
  %v212 = vadd.f32 %v155, %v176
  %v213 = vadd.f32 %v156, %v176
  %v214 = vadd.f32 %v157, %v176
  %v215 = vadd.f32 %v158, %v176
  %v216 = vadd.f32 %v159, %v176
  %v217 = vadd.f32 %v160, %v176
  %v218 = vadd.f32 %v161, %v176
  %v219 = vadd.f32 %v162, %v176
  %v220 = vadd.f32 %v163, %v176
  %v221 = vadd.f32 %v164, %v176
  %v222 = vadd.f32 %v165, %v176
  %v223 = vadd.f32 %v166, %v176
  %v224 = vadd.f32 %v167, %v176
  %v225 = vadd.f32 %v168, %v176
  %v226 = vadd.f32 %v169, %v176
  %v227 = vadd.f32 %v170, %v176
  %v228 = vmul.f32 %v178, 0.1
  %v229 = vmul.f32 %v179, 0.1
  %v230 = vmul.f32 %v180, 0.1
  %v231 = vmul.f32 %v181, 0.1
  %v232 = vmul.f32 %v182, 0.1
  %v233 = vmul.f32 %v183, 0.1
  %v234 = vmul.f32 %v184, 0.1
  %v235 = vmul.f32 %v185, 0.1
  %v236 = vmul.f32 %v186, 0.1
  %v237 = vmul.f32 %v187, 0.1
  %v238 = vmul.f32 %v188, 0.1
  %v239 = vmul.f32 %v189, 0.1
  %v240 = vmul.f32 %v190, 0.1
  %v241 = vmul.f32 %v191, 0.1
  %v242 = vmul.f32 %v192, 0.1
  %v243 = vmul.f32 %v193, 0.1
  %v244 = vmul.f32 %v194, 0.1
  %v245 = vmul.f32 %v195, 0.1
  %v246 = vmul.f32 %v196, 0.1
  %v247 = vmul.f32 %v197, 0.1
  %v248 = vmul.f32 %v198, 0.1
  %v249 = vmul.f32 %v199, 0.1
  %v250 = vmul.f32 %v200, 0.1
  %v251 = vmul.f32 %v201, 0.1
  %v252 = vmul.f32 %v202, 0.1
  %v253 = vmul.f32 %v203, 0.1
  %v254 = vmul.f32 %v204, 0.1
  %v255 = vmul.f32 %v205, 0.1
  %v256 = vmul.f32 %v206, 0.1
  %v257 = vmul.f32 %v207, 0.1
  %v258 = vmul.f32 %v208, 0.1
  %v259 = vmul.f32 %v209, 0.1
  %v260 = vmul.f32 %v210, 0.1
  %v261 = vmul.f32 %v211, 0.1
  %v262 = vmul.f32 %v212, 0.1
  %v263 = vmul.f32 %v213, 0.1
  %v264 = vmul.f32 %v214, 0.1
  %v265 = vmul.f32 %v215, 0.1
  %v266 = vmul.f32 %v216, 0.1
  %v267 = vmul.f32 %v217, 0.1
  %v268 = vmul.f32 %v218, 0.1
  %v269 = vmul.f32 %v219, 0.1
  %v270 = vmul.f32 %v220, 0.1
  %v271 = vmul.f32 %v221, 0.1
  %v272 = vmul.f32 %v222, 0.1
  %v273 = vmul.f32 %v223, 0.1
  %v274 = vmul.f32 %v224, 0.1
  %v275 = vmul.f32 %v225, 0.1
  %v276 = vmul.f32 %v226, 0.1
  %v277 = vmul.f32 %v227, 0.1
  %v278 = vmax.f32 %v178, %v228
  %v279 = vmax.f32 %v179, %v229
  %v280 = vmax.f32 %v180, %v230
  %v281 = vmax.f32 %v181, %v231
  %v282 = vmax.f32 %v182, %v232
  %v283 = vmax.f32 %v183, %v233
  %v284 = vmax.f32 %v184, %v234
  %v285 = vmax.f32 %v185, %v235
  %v286 = vmax.f32 %v186, %v236
  %v287 = vmax.f32 %v187, %v237
  %v288 = vmax.f32 %v188, %v238
  %v289 = vmax.f32 %v189, %v239
  %v290 = vmax.f32 %v190, %v240
  %v291 = vmax.f32 %v191, %v241
  %v292 = vmax.f32 %v192, %v242
  %v293 = vmax.f32 %v193, %v243
  %v294 = vmax.f32 %v194, %v244
  %v295 = vmax.f32 %v195, %v245
  %v296 = vmax.f32 %v196, %v246
  %v297 = vmax.f32 %v197, %v247
  %v298 = vmax.f32 %v198, %v248
  %v299 = vmax.f32 %v199, %v249
  %v300 = vmax.f32 %v200, %v250
  %v301 = vmax.f32 %v201, %v251
  %v302 = vmax.f32 %v202, %v252
  %v303 = vmax.f32 %v203, %v253
  %v304 = vmax.f32 %v204, %v254
  %v305 = vmax.f32 %v205, %v255
  %v306 = vmax.f32 %v206, %v256
  %v307 = vmax.f32 %v207, %v257
  %v308 = vmax.f32 %v208, %v258
  %v309 = vmax.f32 %v209, %v259
  %v310 = vmax.f32 %v210, %v260
  %v311 = vmax.f32 %v211, %v261
  %v312 = vmax.f32 %v212, %v262
  %v313 = vmax.f32 %v213, %v263
  %v314 = vmax.f32 %v214, %v264
  %v315 = vmax.f32 %v215, %v265
  %v316 = vmax.f32 %v216, %v266
  %v317 = vmax.f32 %v217, %v267
  %v318 = vmax.f32 %v218, %v268
  %v319 = vmax.f32 %v219, %v269
  %v320 = vmax.f32 %v220, %v270
  %v321 = vmax.f32 %v221, %v271
  %v322 = vmax.f32 %v222, %v272
  %v323 = vmax.f32 %v223, %v273
  %v324 = vmax.f32 %v224, %v274
  %v325 = vmax.f32 %v225, %v275
  %v326 = vmax.f32 %v226, %v276
  %v327 = vmax.f32 %v227, %v277
  %328 = vst [vmem:[%s3] sm:$0xff] %v278
  %329 = vst [vmem:[%s3 + $0x8] sm:$0xff] %v279
  %330 = vst [vmem:[%s3 + $0x10] sm:$0xff] %v280
  %331 = vst [vmem:[%s3 + $0x18] sm:$0xff] %v281
  %332 = vst [vmem:[%s3 + $0x20] sm:$0xff] %v282
  %333 = vst [vmem:[%s3 + $0x28] sm:$0xff] %v283
  %334 = vst [vmem:[%s3 + $0x30] sm:$0xff] %v284
  %335 = vst [vmem:[%s3 + $0x38] sm:$0xff] %v285
  %336 = vst [vmem:[%s3 + $0x40] sm:$0xff] %v286
  %337 = vst [vmem:[%s3 + $0x48] sm:$0xff] %v287
  %338 = vst [vmem:[%s3 + $0x50] sm:$0xff] %v288
  %339 = vst [vmem:[%s3 + $0x58] sm:$0xff] %v289
  %340 = vst [vmem:[%s3 + $0x60] sm:$0xff] %v290
  %341 = vst [vmem:[%s3 + $0x68] sm:$0xff] %v291
  %342 = vst [vmem:[%s3 + $0x70] sm:$0xff] %v292
  %343 = vst [vmem:[%s3 + $0x78] sm:$0xff] %v293
  %344 = vst [vmem:[%s3 + $0x80] sm:$0xff] %v294
  %345 = vst [vmem:[%s3 + $0x88] sm:$0xff] %v295
  %346 = vst [vmem:[%s3 + $0x90] sm:$0xff] %v296
  %347 = vst [vmem:[%s3 + $0x98] sm:$0xff] %v297
  %348 = vst [vmem:[%s3 + $0xa0] sm:$0xff] %v298
  %349 = vst [vmem:[%s3 + $0xa8] sm:$0xff] %v299
  %350 = vst [vmem:[%s3 + $0xb0] sm:$0xff] %v300
  %351 = vst [vmem:[%s3 + $0xb8] sm:$0xff] %v301
  %352 = vst [vmem:[%s3 + $0xc0] sm:$0xff] %v302
  %353 = vst [vmem:[%s3 + $0xc8] sm:$0xff] %v303
  %354 = vst [vmem:[%s3 + $0xd0] sm:$0xff] %v304
  %355 = vst [vmem:[%s3 + $0xd8] sm:$0xff] %v305
  %356 = vst [vmem:[%s3 + $0xe0] sm:$0xff] %v306
  %357 = vst [vmem:[%s3 + $0xe8] sm:$0xff] %v307
  %358 = vst [vmem:[%s3 + $0xf0] sm:$0xff] %v308
  %359 = vst [vmem:[%s3 + $0xf8] sm:$0xff] %v309
  %360 = vst [vmem:[%s3 + $0x100] sm:$0xff] %v310
  %361 = vst [vmem:[%s3 + $0x108] sm:$0xff] %v311
  %362 = vst [vmem:[%s3 + $0x110] sm:$0xff] %v312
  %363 = vst [vmem:[%s3 + $0x118] sm:$0xff] %v313
  %364 = vst [vmem:[%s3 + $0x120] sm:$0xff] %v314
  %365 = vst [vmem:[%s3 + $0x128] sm:$0xff] %v315
  %366 = vst [vmem:[%s3 + $0x130] sm:$0xff] %v316
  %367 = vst [vmem:[%s3 + $0x138] sm:$0xff] %v317
  %368 = vst [vmem:[%s3 + $0x140] sm:$0xff] %v318
  %369 = vst [vmem:[%s3 + $0x148] sm:$0xff] %v319
  %370 = vst [vmem:[%s3 + $0x150] sm:$0xff] %v320
  %371 = vst [vmem:[%s3 + $0x158] sm:$0xff] %v321
  %372 = vst [vmem:[%s3 + $0x160] sm:$0xff] %v322
  %373 = vst [vmem:[%s3 + $0x168] sm:$0xff] %v323
  %374 = vst [vmem:[%s3 + $0x170] sm:$0xff] %v324
  %375 = vst [vmem:[%s3 + $0x178] sm:$0xff] %v325
  %376 = vst [vmem:[%s3 + $0x180] sm:$0xff] %v326
  %377 = vst [vmem:[%s3 + $0x188] sm:$0xff] %v327
  // Predicated region
  $region14: #{_forward.3} parent=0 // pred_check
    _
  $region15: #{_forward.3} parent=0 // pred_check_branch
    %379 = sbr.rel (0) target = $region17
  $region16: #{_forward.3} parent=0 // pred_region
    _
  $region17: #{_forward.3} parent=0 // pred_fallthru
    _
  // Predicated region
  $region18: #{_forward.3} parent=0 // pred_check
    _
  $region19: #{_forward.3} parent=0 // pred_check_branch
    %381 = sbr.rel (0) target = $region21
  $region20: #{_forward.3} parent=0 // pred_region
    _
  $region21: #{_forward.3} parent=0 // pred_fallthru
    _

// kernel: _forward.2
$region0: #{_forward.2}
  #allocation0 [shape = 'u32[]', space=smem, size = 0x4, offset = 0x4, fixed_abs, tag = 'smem constant byte address 0x4 - core index']
  #allocation1 [shape = 'u32[144,128]{1,0:T(1,128)}', space=vmem, size = 0x12000, scoped, tag = 'internal scratch']
  #allocation2 [shape = 'f32[400,128]{1,0:T(8,128)}', space=vmem, size = 0x32000, scoped, tag = 'scratch operand']
  %s0 = inlined_call_operand.vmem [shape: bf16[400,128], index: 0, kind: input, shape index: {}]
  %s1 = inlined_call_operand.vmem [shape: bf16[128,128], index: 1, kind: input, shape index: {}]
  %s2 = inlined_call_operand.vmem [shape: bf16[400,128], index: 2, kind: output, shape index: {0}]
  %s3 = inlined_call_operand.vmem [shape: f32[1,128], index: 3, kind: output, shape index: {1}]
  %s4 = inlined_call_operand.vmem [shape: f32[1,128], index: 4, kind: output, shape index: {2}]
  %5 = xla_tuple %s2, %s3, %s4
  %s6 = sld [smem:[#allocation0]]
  $region42: #{_forward.2} parent=0
    _
  %s8 = ssub.s32 1, %s6
  %s9 = scalar_select 0, %s8, %s6
  // Predicated region
  $region2: #{_forward.2} parent=0 // pred_check
    _
  $region3: #{_forward.2} parent=0 // pred_check_branch
    %11 = sbr.rel (0) target = $region5
  $region4: #{_forward.2} parent=0 // pred_region
    _
  $region5: #{_forward.2} parent=0 // pred_fallthru
    _
  // Predicated region
  $region6: #{_forward.2} parent=0 // pred_check
    _
  $region7: #{_forward.2} parent=0 // pred_check_branch
    %13 = sbr.rel (0) target = $region9
  $region8: #{_forward.2} parent=0 // pred_region
    _
  $region9: #{_forward.2} parent=0 // pred_fallthru
    _
  %p15 = scmp.eq.s32.totalorder 0, 0
  // Predicated region
  $region10: #{_forward.2} parent=0 // pred_check
    %p16 = pneg %p15
  $region11: #{_forward.2} parent=0 // pred_check_branch
    %18 = sbr.rel (%p16) target = $region13
  $region12: #{_forward.2} parent=0 // pred_region
    %19 = vst [vmem:[#allocation2] sm:$0xff] 0.0
    %20 = vst [vmem:[#allocation2 + $0x8] sm:$0xff] 0.0
    %21 = vst [vmem:[#allocation2 + $0x10] sm:$0xff] 0.0
    %22 = vst [vmem:[#allocation2 + $0x18] sm:$0xff] 0.0
    %23 = vst [vmem:[#allocation2 + $0x20] sm:$0xff] 0.0
    %24 = vst [vmem:[#allocation2 + $0x28] sm:$0xff] 0.0
    %25 = vst [vmem:[#allocation2 + $0x30] sm:$0xff] 0.0
    %26 = vst [vmem:[#allocation2 + $0x38] sm:$0xff] 0.0
    %27 = vst [vmem:[#allocation2 + $0x40] sm:$0xff] 0.0
    %28 = vst [vmem:[#allocation2 + $0x48] sm:$0xff] 0.0
    %29 = vst [vmem:[#allocation2 + $0x50] sm:$0xff] 0.0
    %30 = vst [vmem:[#allocation2 + $0x58] sm:$0xff] 0.0
    %31 = vst [vmem:[#allocation2 + $0x60] sm:$0xff] 0.0
    %32 = vst [vmem:[#allocation2 + $0x68] sm:$0xff] 0.0
    %33 = vst [vmem:[#allocation2 + $0x70] sm:$0xff] 0.0
    %34 = vst [vmem:[#allocation2 + $0x78] sm:$0xff] 0.0
    %35 = vst [vmem:[#allocation2 + $0x80] sm:$0xff] 0.0
    %36 = vst [vmem:[#allocation2 + $0x88] sm:$0xff] 0.0
    %37 = vst [vmem:[#allocation2 + $0x90] sm:$0xff] 0.0
    %38 = vst [vmem:[#allocation2 + $0x98] sm:$0xff] 0.0
    %39 = vst [vmem:[#allocation2 + $0xa0] sm:$0xff] 0.0
    %40 = vst [vmem:[#allocation2 + $0xa8] sm:$0xff] 0.0
    %41 = vst [vmem:[#allocation2 + $0xb0] sm:$0xff] 0.0
    %42 = vst [vmem:[#allocation2 + $0xb8] sm:$0xff] 0.0
    %43 = vst [vmem:[#allocation2 + $0xc0] sm:$0xff] 0.0
    %44 = vst [vmem:[#allocation2 + $0xc8] sm:$0xff] 0.0
    %45 = vst [vmem:[#allocation2 + $0xd0] sm:$0xff] 0.0
    %46 = vst [vmem:[#allocation2 + $0xd8] sm:$0xff] 0.0
    %47 = vst [vmem:[#allocation2 + $0xe0] sm:$0xff] 0.0
    %48 = vst [vmem:[#allocation2 + $0xe8] sm:$0xff] 0.0
    %49 = vst [vmem:[#allocation2 + $0xf0] sm:$0xff] 0.0
    %50 = vst [vmem:[#allocation2 + $0xf8] sm:$0xff] 0.0
    %51 = vst [vmem:[#allocation2 + $0x100] sm:$0xff] 0.0
    %52 = vst [vmem:[#allocation2 + $0x108] sm:$0xff] 0.0
    %53 = vst [vmem:[#allocation2 + $0x110] sm:$0xff] 0.0
    %54 = vst [vmem:[#allocation2 + $0x118] sm:$0xff] 0.0
    %55 = vst [vmem:[#allocation2 + $0x120] sm:$0xff] 0.0
    %56 = vst [vmem:[#allocation2 + $0x128] sm:$0xff] 0.0
    %57 = vst [vmem:[#allocation2 + $0x130] sm:$0xff] 0.0
    %58 = vst [vmem:[#allocation2 + $0x138] sm:$0xff] 0.0
    %59 = vst [vmem:[#allocation2 + $0x140] sm:$0xff] 0.0
    %60 = vst [vmem:[#allocation2 + $0x148] sm:$0xff] 0.0
    %61 = vst [vmem:[#allocation2 + $0x150] sm:$0xff] 0.0
    %62 = vst [vmem:[#allocation2 + $0x158] sm:$0xff] 0.0
    %63 = vst [vmem:[#allocation2 + $0x160] sm:$0xff] 0.0
    %64 = vst [vmem:[#allocation2 + $0x168] sm:$0xff] 0.0
    %65 = vst [vmem:[#allocation2 + $0x170] sm:$0xff] 0.0
    %66 = vst [vmem:[#allocation2 + $0x178] sm:$0xff] 0.0
    %67 = vst [vmem:[#allocation2 + $0x180] sm:$0xff] 0.0
    %68 = vst [vmem:[#allocation2 + $0x188] sm:$0xff] 0.0
  $region13: #{_forward.2} parent=0 // pred_fallthru
    _
  %v69 = vld [vmem:[#allocation2] sm:$0xff]
  %v70 = vld [vmem:[#allocation2 + $0x8] sm:$0xff]
  %v71 = vld [vmem:[#allocation2 + $0x10] sm:$0xff]
  %v72 = vld [vmem:[#allocation2 + $0x18] sm:$0xff]
  %v73 = vld [vmem:[#allocation2 + $0x20] sm:$0xff]
  %v74 = vld [vmem:[#allocation2 + $0x28] sm:$0xff]
  %v75 = vld [vmem:[#allocation2 + $0x30] sm:$0xff]
  %v76 = vld [vmem:[#allocation2 + $0x38] sm:$0xff]
  %v77 = vld [vmem:[#allocation2 + $0x40] sm:$0xff]
  %v78 = vld [vmem:[#allocation2 + $0x48] sm:$0xff]
  %v79 = vld [vmem:[#allocation2 + $0x50] sm:$0xff]
  %v80 = vld [vmem:[#allocation2 + $0x58] sm:$0xff]
  %v81 = vld [vmem:[#allocation2 + $0x60] sm:$0xff]
  %v82 = vld [vmem:[#allocation2 + $0x68] sm:$0xff]
  %v83 = vld [vmem:[#allocation2 + $0x70] sm:$0xff]
  %v84 = vld [vmem:[#allocation2 + $0x78] sm:$0xff]
  %v85 = vld [vmem:[#allocation2 + $0x80] sm:$0xff]
  %v86 = vld [vmem:[#allocation2 + $0x88] sm:$0xff]
  %v87 = vld [vmem:[#allocation2 + $0x90] sm:$0xff]
  %v88 = vld [vmem:[#allocation2 + $0x98] sm:$0xff]
  %v89 = vld [vmem:[#allocation2 + $0xa0] sm:$0xff]
  %v90 = vld [vmem:[#allocation2 + $0xa8] sm:$0xff]
  %v91 = vld [vmem:[#allocation2 + $0xb0] sm:$0xff]
  %v92 = vld [vmem:[#allocation2 + $0xb8] sm:$0xff]
  %v93 = vld [vmem:[#allocation2 + $0xc0] sm:$0xff]
  %v94 = vld [vmem:[#allocation2 + $0xc8] sm:$0xff]
  %v95 = vld [vmem:[#allocation2 + $0xd0] sm:$0xff]
  %v96 = vld [vmem:[#allocation2 + $0xd8] sm:$0xff]
  %v97 = vld [vmem:[#allocation2 + $0xe0] sm:$0xff]
  %v98 = vld [vmem:[#allocation2 + $0xe8] sm:$0xff]
  %v99 = vld [vmem:[#allocation2 + $0xf0] sm:$0xff]
  %v100 = vld [vmem:[#allocation2 + $0xf8] sm:$0xff]
  %v101 = vld [vmem:[#allocation2 + $0x100] sm:$0xff]
  %v102 = vld [vmem:[#allocation2 + $0x108] sm:$0xff]
  %v103 = vld [vmem:[#allocation2 + $0x110] sm:$0xff]
  %v104 = vld [vmem:[#allocation2 + $0x118] sm:$0xff]
  %v105 = vld [vmem:[#allocation2 + $0x120] sm:$0xff]
  %v106 = vld [vmem:[#allocation2 + $0x128] sm:$0xff]
  %v107 = vld [vmem:[#allocation2 + $0x130] sm:$0xff]
  %v108 = vld [vmem:[#allocation2 + $0x138] sm:$0xff]
  %v109 = vld [vmem:[#allocation2 + $0x140] sm:$0xff]
  %v110 = vld [vmem:[#allocation2 + $0x148] sm:$0xff]
  %v111 = vld [vmem:[#allocation2 + $0x150] sm:$0xff]
  %v112 = vld [vmem:[#allocation2 + $0x158] sm:$0xff]
  %v113 = vld [vmem:[#allocation2 + $0x160] sm:$0xff]
  %v114 = vld [vmem:[#allocation2 + $0x168] sm:$0xff]
  %v115 = vld [vmem:[#allocation2 + $0x170] sm:$0xff]
  %v116 = vld [vmem:[#allocation2 + $0x178] sm:$0xff]
  %v117 = vld [vmem:[#allocation2 + $0x180] sm:$0xff]
  %v118 = vld [vmem:[#allocation2 + $0x188] sm:$0xff]
  %v119 = vld [vmem:[%s0] sm:$0xf]
  %v120 = vld [vmem:[%s0 + $0x4] sm:$0xf]
  %v121 = vld [vmem:[%s0 + $0x8] sm:$0xf]
  %v122 = vld [vmem:[%s0 + $0xc] sm:$0xf]
  %v123 = vld [vmem:[%s0 + $0x10] sm:$0xf]
  %v124 = vld [vmem:[%s0 + $0x14] sm:$0xf]
  %v125 = vld [vmem:[%s0 + $0x18] sm:$0xf]
  %v126 = vld [vmem:[%s0 + $0x1c] sm:$0xf]
  %v127 = vld [vmem:[%s0 + $0x20] sm:$0xf]
  %v128 = vld [vmem:[%s0 + $0x24] sm:$0xf]
  %v129 = vld [vmem:[%s0 + $0x28] sm:$0xf]
  %v130 = vld [vmem:[%s0 + $0x2c] sm:$0xf]
  %v131 = vld [vmem:[%s0 + $0x30] sm:$0xf]
  %v132 = vld [vmem:[%s0 + $0x34] sm:$0xf]
  %v133 = vld [vmem:[%s0 + $0x38] sm:$0xf]
  %v134 = vld [vmem:[%s0 + $0x3c] sm:$0xf]
  %v135 = vld [vmem:[%s0 + $0x40] sm:$0xf]
  %v136 = vld [vmem:[%s0 + $0x44] sm:$0xf]
  %v137 = vld [vmem:[%s0 + $0x48] sm:$0xf]
  %v138 = vld [vmem:[%s0 + $0x4c] sm:$0xf]
  %v139 = vld [vmem:[%s0 + $0x50] sm:$0xf]
  %v140 = vld [vmem:[%s0 + $0x54] sm:$0xf]
  %v141 = vld [vmem:[%s0 + $0x58] sm:$0xf]
  %v142 = vld [vmem:[%s0 + $0x5c] sm:$0xf]
  %v143 = vld [vmem:[%s0 + $0x60] sm:$0xf]
  %v144 = vld [vmem:[%s0 + $0x64] sm:$0xf]
  %v145 = vld [vmem:[%s0 + $0x68] sm:$0xf]
  %v146 = vld [vmem:[%s0 + $0x6c] sm:$0xf]
  %v147 = vld [vmem:[%s0 + $0x70] sm:$0xf]
  %v148 = vld [vmem:[%s0 + $0x74] sm:$0xf]
  %v149 = vld [vmem:[%s0 + $0x78] sm:$0xf]
  %v150 = vld [vmem:[%s0 + $0x7c] sm:$0xf]
  %v151 = vld [vmem:[%s0 + $0x80] sm:$0xf]
  %v152 = vld [vmem:[%s0 + $0x84] sm:$0xf]
  %v153 = vld [vmem:[%s0 + $0x88] sm:$0xf]
  %v154 = vld [vmem:[%s0 + $0x8c] sm:$0xf]
  %v155 = vld [vmem:[%s0 + $0x90] sm:$0xf]
  %v156 = vld [vmem:[%s0 + $0x94] sm:$0xf]
  %v157 = vld [vmem:[%s0 + $0x98] sm:$0xf]
  %v158 = vld [vmem:[%s0 + $0x9c] sm:$0xf]
  %v159 = vld [vmem:[%s0 + $0xa0] sm:$0xf]
  %v160 = vld [vmem:[%s0 + $0xa4] sm:$0xf]
  %v161 = vld [vmem:[%s0 + $0xa8] sm:$0xf]
  %v162 = vld [vmem:[%s0 + $0xac] sm:$0xf]
  %v163 = vld [vmem:[%s0 + $0xb0] sm:$0xf]
  %v164 = vld [vmem:[%s0 + $0xb4] sm:$0xf]
  %v165 = vld [vmem:[%s0 + $0xb8] sm:$0xf]
  %v166 = vld [vmem:[%s0 + $0xbc] sm:$0xf]
  %v167 = vld [vmem:[%s0 + $0xc0] sm:$0xf]
  %v168 = vld [vmem:[%s0 + $0xc4] sm:$0xf]
  %v169 = vld [vmem:[%s1] sm:$0xf]
  %v170 = vld [vmem:[%s1 + $0x4] sm:$0xf]
  %v171 = vld [vmem:[%s1 + $0x8] sm:$0xf]
  %v172 = vld [vmem:[%s1 + $0xc] sm:$0xf]
  %v173 = vld [vmem:[%s1 + $0x10] sm:$0xf]
  %v174 = vld [vmem:[%s1 + $0x14] sm:$0xf]
  %v175 = vld [vmem:[%s1 + $0x18] sm:$0xf]
  %v176 = vld [vmem:[%s1 + $0x1c] sm:$0xf]
  %v177 = vld [vmem:[%s1 + $0x20] sm:$0xf]
  %v178 = vld [vmem:[%s1 + $0x24] sm:$0xf]
  %v179 = vld [vmem:[%s1 + $0x28] sm:$0xf]
  %v180 = vld [vmem:[%s1 + $0x2c] sm:$0xf]
  %v181 = vld [vmem:[%s1 + $0x30] sm:$0xf]
  %v182 = vld [vmem:[%s1 + $0x34] sm:$0xf]
  %v183 = vld [vmem:[%s1 + $0x38] sm:$0xf]
  %v184 = vld [vmem:[%s1 + $0x3c] sm:$0xf]
  %v235 = vunpack.c.l.b16 %v119
  %v236 = vunpack.c.l.b16 %v120
  %v237 = vunpack.c.l.b16 %v121
  %v238 = vunpack.c.l.b16 %v122
  %v239 = vunpack.c.l.b16 %v123
  %v240 = vunpack.c.l.b16 %v124
  %v241 = vunpack.c.l.b16 %v125
  %v242 = vunpack.c.l.b16 %v126
  %v243 = vunpack.c.l.b16 %v127
  %v244 = vunpack.c.l.b16 %v128
  %v245 = vunpack.c.l.b16 %v129
  %v246 = vunpack.c.l.b16 %v130
  %v247 = vunpack.c.l.b16 %v131
  %v248 = vunpack.c.l.b16 %v132
  %v249 = vunpack.c.l.b16 %v133
  %v250 = vunpack.c.l.b16 %v134
  %v251 = vunpack.c.l.b16 %v135
  %v252 = vunpack.c.l.b16 %v136
  %v253 = vunpack.c.l.b16 %v137
  %v254 = vunpack.c.l.b16 %v138
  %v255 = vunpack.c.l.b16 %v139
  %v256 = vunpack.c.l.b16 %v140
  %v257 = vunpack.c.l.b16 %v141
  %v258 = vunpack.c.l.b16 %v142
  %v259 = vunpack.c.l.b16 %v143
  %v260 = vunpack.c.l.b16 %v144
  %v261 = vunpack.c.l.b16 %v145
  %v262 = vunpack.c.l.b16 %v146
  %v263 = vunpack.c.l.b16 %v147
  %v264 = vunpack.c.l.b16 %v148
  %v265 = vunpack.c.l.b16 %v149
  %v266 = vunpack.c.l.b16 %v150
  %v267 = vunpack.c.l.b16 %v151
  %v268 = vunpack.c.l.b16 %v152
  %v269 = vunpack.c.l.b16 %v153
  %v270 = vunpack.c.l.b16 %v154
  %v271 = vunpack.c.l.b16 %v155
  %v272 = vunpack.c.l.b16 %v156
  %v273 = vunpack.c.l.b16 %v157
  %v274 = vunpack.c.l.b16 %v158
  %v275 = vunpack.c.l.b16 %v159
  %v276 = vunpack.c.l.b16 %v160
  %v277 = vunpack.c.l.b16 %v161
  %v278 = vunpack.c.l.b16 %v162
  %v279 = vunpack.c.l.b16 %v163
  %v280 = vunpack.c.l.b16 %v164
  %v281 = vunpack.c.l.b16 %v165
  %v282 = vunpack.c.l.b16 %v166
  %v283 = vunpack.c.l.b16 %v167
  %v284 = vunpack.c.l.b16 %v168
  %v285 = vpack.c.b16 %v236, %v235
  %v286 = vpack.c.b16 %v238, %v237
  %v287 = vpack.c.b16 %v240, %v239
  %v288 = vpack.c.b16 %v242, %v241
  %v289 = vpack.c.b16 %v244, %v243
  %v290 = vpack.c.b16 %v246, %v245
  %v291 = vpack.c.b16 %v248, %v247
  %v292 = vpack.c.b16 %v250, %v249
  %v293 = vpack.c.b16 %v252, %v251
  %v294 = vpack.c.b16 %v254, %v253
  %v295 = vpack.c.b16 %v256, %v255
  %v296 = vpack.c.b16 %v258, %v257
  %v297 = vpack.c.b16 %v260, %v259
  %v298 = vpack.c.b16 %v262, %v261
  %v299 = vpack.c.b16 %v264, %v263
  %v300 = vpack.c.b16 %v266, %v265
  %v301 = vpack.c.b16 %v268, %v267
  %v302 = vpack.c.b16 %v270, %v269
  %v303 = vpack.c.b16 %v272, %v271
  %v304 = vpack.c.b16 %v274, %v273
  %v305 = vpack.c.b16 %v276, %v275
  %v306 = vpack.c.b16 %v278, %v277
  %v307 = vpack.c.b16 %v280, %v279
  %v308 = vpack.c.b16 %v282, %v281
  %v309 = vpack.c.b16 %v284, %v283
  %v351 = vunpack.c.l.b16 %v169
  %v352 = vunpack.c.l.b16 %v170
  %v353 = vunpack.c.l.b16 %v171
  %v354 = vunpack.c.l.b16 %v172
  %v355 = vunpack.c.l.b16 %v173
  %v356 = vunpack.c.l.b16 %v174
  %v357 = vunpack.c.l.b16 %v175
  %v358 = vunpack.c.l.b16 %v176
  %v359 = vunpack.c.l.b16 %v177
  %v360 = vunpack.c.l.b16 %v178
  %v361 = vunpack.c.l.b16 %v179
  %v362 = vunpack.c.l.b16 %v180
  %v363 = vunpack.c.l.b16 %v181
  %v364 = vunpack.c.l.b16 %v182
  %v365 = vunpack.c.l.b16 %v183
  %v366 = vunpack.c.l.b16 %v184
  %v367 = vpack.c.b16 %v352, %v351
  %v368 = vpack.c.b16 %v354, %v353
  %v369 = vpack.c.b16 %v356, %v355
  %v370 = vpack.c.b16 %v358, %v357
  %v371 = vpack.c.b16 %v360, %v359
  %v372 = vpack.c.b16 %v362, %v361
  %v373 = vpack.c.b16 %v364, %v363
  %v374 = vpack.c.b16 %v366, %v365
  %383 = vmatprep.subr.bf16.mxu0 0
  %384 = vmatpush1.bf16.msra.mxu0 %v367
  %385 = vmatprep.subr.bf16.mxu0 0
  %386 = vmatpush1.bf16.msra.mxu0 %v368
  %387 = vmatprep.subr.bf16.mxu0 0
  %388 = vmatpush1.bf16.msra.mxu0 %v369
  %389 = vmatprep.subr.bf16.mxu0 0
  %390 = vmatpush1.bf16.msra.mxu0 %v370
  %391 = vmatprep.subr.bf16.mxu0 0
  %392 = vmatpush1.bf16.msra.mxu0 %v371
  %393 = vmatprep.subr.bf16.mxu0 0
  %394 = vmatpush1.bf16.msra.mxu0 %v372
  %395 = vmatprep.subr.bf16.mxu0 0
  %396 = vmatpush1.bf16.msra.mxu0 %v373
  %397 = vmatprep.subr.bf16.mxu0 0
  %398 = vmatpush1.bf16.msra.mxu0 %v374
  %399 = vmatprep.subr.bf16.mxu0 0
  %400 = vmatpush1.bf16.msra.mxu0 0
  %401 = vmatprep.subr.bf16.mxu0 0
  %402 = vmatpush1.bf16.msra.mxu0 0
  %403 = vmatprep.subr.bf16.mxu0 0
  %404 = vmatpush1.bf16.msra.mxu0 0
  %405 = vmatprep.subr.bf16.mxu0 0
  %406 = vmatpush1.bf16.msra.mxu0 0
  %407 = vmatprep.subr.bf16.mxu0 0
  %408 = vmatpush1.bf16.msra.mxu0 0
  %409 = vmatprep.subr.bf16.mxu0 0
  %410 = vmatpush1.bf16.msra.mxu0 0
  %411 = vmatprep.subr.bf16.mxu0 0
  %412 = vmatpush1.bf16.msra.mxu0 0
  %413 = vmatprep.subr.bf16.mxu0 0
  %414 = vmatpush1.bf16.msra.mxu0 0
  %415 = vmatprep.mubr.bf16.mxu0 0
  %416 = vmatmul.mubr.bf16.gmra.mrb[0].mxu0 %v285
  %v417 = vpop.f32.mrb[0].mxu0
  %v418 = vadd.f32 0.0, %v417
  %v419 = vpop.f32.mrb[0].mxu0
  %v420 = vpop.f32.mrb[0].mxu0
  %v421 = vadd.f32 0.0, %v420
  %v422 = vpop.f32.mrb[0].mxu0
  %423 = vmatprep.mubr.bf16.mxu0 0
  %424 = vmatmul.mubr.bf16.gmra.mrb[0].mxu0 %v286
  %v425 = vpop.f32.mrb[0].mxu0
  %v426 = vadd.f32 0.0, %v425
  %v427 = vpop.f32.mrb[0].mxu0
  %v428 = vpop.f32.mrb[0].mxu0
  %v429 = vadd.f32 0.0, %v428
  %v430 = vpop.f32.mrb[0].mxu0
  %431 = vmatprep.mubr.bf16.mxu0 0
  %432 = vmatmul.mubr.bf16.gmra.mrb[0].mxu0 %v287
  %v433 = vpop.f32.mrb[0].mxu0
  %v434 = vadd.f32 0.0, %v433
  %v435 = vpop.f32.mrb[0].mxu0
  %v436 = vpop.f32.mrb[0].mxu0
  %v437 = vadd.f32 0.0, %v436
  %v438 = vpop.f32.mrb[0].mxu0
  %439 = vmatprep.mubr.bf16.mxu0 0
  %440 = vmatmul.mubr.bf16.gmra.mrb[0].mxu0 %v288
  %v441 = vpop.f32.mrb[0].mxu0
  %v442 = vadd.f32 0.0, %v441
  %v443 = vpop.f32.mrb[0].mxu0
  %v444 = vpop.f32.mrb[0].mxu0
  %v445 = vadd.f32 0.0, %v444
  %v446 = vpop.f32.mrb[0].mxu0
  %447 = vmatprep.mubr.bf16.mxu0 0
  %448 = vmatmul.mubr.bf16.gmra.mrb[0].mxu0 %v289
  %v449 = vpop.f32.mrb[0].mxu0
  %v450 = vadd.f32 0.0, %v449
  %v451 = vpop.f32.mrb[0].mxu0
  %v452 = vpop.f32.mrb[0].mxu0
  %v453 = vadd.f32 0.0, %v452
  %v454 = vpop.f32.mrb[0].mxu0
  %455 = vmatprep.mubr.bf16.mxu0 0
  %456 = vmatmul.mubr.bf16.gmra.mrb[0].mxu0 %v290
  %v457 = vpop.f32.mrb[0].mxu0
  %v458 = vadd.f32 0.0, %v457
  %v459 = vpop.f32.mrb[0].mxu0
  %v460 = vpop.f32.mrb[0].mxu0
  %v461 = vadd.f32 0.0, %v460
  %v462 = vpop.f32.mrb[0].mxu0
  %463 = vmatprep.mubr.bf16.mxu0 0
  %464 = vmatmul.mubr.bf16.gmra.mrb[0].mxu0 %v291
  %v465 = vpop.f32.mrb[0].mxu0
  %v466 = vadd.f32 0.0, %v465
  %v467 = vpop.f32.mrb[0].mxu0
  %v468 = vpop.f32.mrb[0].mxu0
  %v469 = vadd.f32 0.0, %v468
  %v470 = vpop.f32.mrb[0].mxu0
  %471 = vmatprep.mubr.bf16.mxu0 0
  %472 = vmatmul.mubr.bf16.gmra.mrb[0].mxu0 %v292
  %v473 = vpop.f32.mrb[0].mxu0
  %v474 = vadd.f32 0.0, %v473
  %v475 = vpop.f32.mrb[0].mxu0
  %v476 = vpop.f32.mrb[0].mxu0
  %v477 = vadd.f32 0.0, %v476
  %v478 = vpop.f32.mrb[0].mxu0
  %479 = vmatprep.mubr.bf16.mxu0 0
  %480 = vmatmul.mubr.bf16.gmra.mrb[0].mxu0 %v293
  %v481 = vpop.f32.mrb[0].mxu0
  %v482 = vadd.f32 0.0, %v481
  %v483 = vpop.f32.mrb[0].mxu0
  %v484 = vpop.f32.mrb[0].mxu0
  %v485 = vadd.f32 0.0, %v484
  %v486 = vpop.f32.mrb[0].mxu0
  %487 = vmatprep.mubr.bf16.mxu0 0
  %488 = vmatmul.mubr.bf16.gmra.mrb[0].mxu0 %v294
  %v489 = vpop.f32.mrb[0].mxu0
  %v490 = vadd.f32 0.0, %v489
  %v491 = vpop.f32.mrb[0].mxu0
  %v492 = vpop.f32.mrb[0].mxu0
  %v493 = vadd.f32 0.0, %v492
  %v494 = vpop.f32.mrb[0].mxu0
  %495 = vmatprep.mubr.bf16.mxu0 0
  %496 = vmatmul.mubr.bf16.gmra.mrb[0].mxu0 %v295
  %v497 = vpop.f32.mrb[0].mxu0
  %v498 = vadd.f32 0.0, %v497
  %v499 = vpop.f32.mrb[0].mxu0
  %v500 = vpop.f32.mrb[0].mxu0
  %v501 = vadd.f32 0.0, %v500
  %v502 = vpop.f32.mrb[0].mxu0
  %503 = vmatprep.mubr.bf16.mxu0 0
  %504 = vmatmul.mubr.bf16.gmra.mrb[0].mxu0 %v296
  %v505 = vpop.f32.mrb[0].mxu0
  %v506 = vadd.f32 0.0, %v505
  %v507 = vpop.f32.mrb[0].mxu0
  %v508 = vpop.f32.mrb[0].mxu0
  %v509 = vadd.f32 0.0, %v508
  %v510 = vpop.f32.mrb[0].mxu0
  %511 = vmatprep.mubr.bf16.mxu0 0
  %512 = vmatmul.mubr.bf16.gmra.mrb[0].mxu0 %v297
  %v513 = vpop.f32.mrb[0].mxu0
  %v514 = vadd.f32 0.0, %v513
  %v515 = vpop.f32.mrb[0].mxu0
  %v516 = vpop.f32.mrb[0].mxu0
  %v517 = vadd.f32 0.0, %v516
  %v518 = vpop.f32.mrb[0].mxu0
  %519 = vmatprep.mubr.bf16.mxu0 0
  %520 = vmatmul.mubr.bf16.gmra.mrb[0].mxu0 %v298
  %v521 = vpop.f32.mrb[0].mxu0
  %v522 = vadd.f32 0.0, %v521
  %v523 = vpop.f32.mrb[0].mxu0
  %v524 = vpop.f32.mrb[0].mxu0
  %v525 = vadd.f32 0.0, %v524
  %v526 = vpop.f32.mrb[0].mxu0
  %527 = vmatprep.mubr.bf16.mxu0 0
  %528 = vmatmul.mubr.bf16.gmra.mrb[0].mxu0 %v299
  %v529 = vpop.f32.mrb[0].mxu0
  %v530 = vadd.f32 0.0, %v529
  %v531 = vpop.f32.mrb[0].mxu0
  %v532 = vpop.f32.mrb[0].mxu0
  %v533 = vadd.f32 0.0, %v532
  %v534 = vpop.f32.mrb[0].mxu0
  %535 = vmatprep.mubr.bf16.mxu0 0
  %536 = vmatmul.mubr.bf16.gmra.mrb[0].mxu0 %v300
  %v537 = vpop.f32.mrb[0].mxu0
  %v538 = vadd.f32 0.0, %v537
  %v539 = vpop.f32.mrb[0].mxu0
  %v540 = vpop.f32.mrb[0].mxu0
  %v541 = vadd.f32 0.0, %v540
  %v542 = vpop.f32.mrb[0].mxu0
  %543 = vmatprep.mubr.bf16.mxu0 0
  %544 = vmatmul.mubr.bf16.gmra.mrb[0].mxu0 %v301
  %v545 = vpop.f32.mrb[0].mxu0
  %v546 = vadd.f32 0.0, %v545
  %v547 = vpop.f32.mrb[0].mxu0
  %v548 = vpop.f32.mrb[0].mxu0
  %v549 = vadd.f32 0.0, %v548
  %v550 = vpop.f32.mrb[0].mxu0
  %551 = vmatprep.mubr.bf16.mxu0 0
  %552 = vmatmul.mubr.bf16.gmra.mrb[0].mxu0 %v302
  %v553 = vpop.f32.mrb[0].mxu0
  %v554 = vadd.f32 0.0, %v553
  %v555 = vpop.f32.mrb[0].mxu0
  %v556 = vpop.f32.mrb[0].mxu0
  %v557 = vadd.f32 0.0, %v556
  %v558 = vpop.f32.mrb[0].mxu0
  %559 = vmatprep.mubr.bf16.mxu0 0
  %560 = vmatmul.mubr.bf16.gmra.mrb[0].mxu0 %v303
  %v561 = vpop.f32.mrb[0].mxu0
  %v562 = vadd.f32 0.0, %v561
  %v563 = vpop.f32.mrb[0].mxu0
  %v564 = vpop.f32.mrb[0].mxu0
  %v565 = vadd.f32 0.0, %v564
  %v566 = vpop.f32.mrb[0].mxu0
  %567 = vmatprep.mubr.bf16.mxu0 0
  %568 = vmatmul.mubr.bf16.gmra.mrb[0].mxu0 %v304
  %v569 = vpop.f32.mrb[0].mxu0
  %v570 = vadd.f32 0.0, %v569
  %v571 = vpop.f32.mrb[0].mxu0
  %v572 = vpop.f32.mrb[0].mxu0
  %v573 = vadd.f32 0.0, %v572
  %v574 = vpop.f32.mrb[0].mxu0
  %575 = vmatprep.mubr.bf16.mxu0 0
  %576 = vmatmul.mubr.bf16.gmra.mrb[0].mxu0 %v305
  %v577 = vpop.f32.mrb[0].mxu0
  %v578 = vadd.f32 0.0, %v577
  %v579 = vpop.f32.mrb[0].mxu0
  %v580 = vpop.f32.mrb[0].mxu0
  %v581 = vadd.f32 0.0, %v580
  %v582 = vpop.f32.mrb[0].mxu0
  %583 = vmatprep.mubr.bf16.mxu0 0
  %584 = vmatmul.mubr.bf16.gmra.mrb[0].mxu0 %v306
  %v585 = vpop.f32.mrb[0].mxu0
  %v586 = vadd.f32 0.0, %v585
  %v587 = vpop.f32.mrb[0].mxu0
  %v588 = vpop.f32.mrb[0].mxu0
  %v589 = vadd.f32 0.0, %v588
  %v590 = vpop.f32.mrb[0].mxu0
  %591 = vmatprep.mubr.bf16.mxu0 0
  %592 = vmatmul.mubr.bf16.gmra.mrb[0].mxu0 %v307
  %v593 = vpop.f32.mrb[0].mxu0
  %v594 = vadd.f32 0.0, %v593
  %v595 = vpop.f32.mrb[0].mxu0
  %v596 = vpop.f32.mrb[0].mxu0
  %v597 = vadd.f32 0.0, %v596
  %v598 = vpop.f32.mrb[0].mxu0
  %599 = vmatprep.mubr.bf16.mxu0 0
  %600 = vmatmul.mubr.bf16.gmra.mrb[0].mxu0 %v308
  %v601 = vpop.f32.mrb[0].mxu0
  %v602 = vadd.f32 0.0, %v601
  %v603 = vpop.f32.mrb[0].mxu0
  %v604 = vpop.f32.mrb[0].mxu0
  %v605 = vadd.f32 0.0, %v604
  %v606 = vpop.f32.mrb[0].mxu0
  %607 = vmatprep.mubr.bf16.mxu0 0
  %608 = vmatmul.mubr.bf16.gmra.mrb[0].mxu0 %v309
  %v609 = vpop.f32.mrb[0].mxu0
  %v610 = vadd.f32 0.0, %v609
  %v611 = vpop.f32.mrb[0].mxu0
  %v612 = vpop.f32.mrb[0].mxu0
  %v613 = vadd.f32 0.0, %v612
  %v614 = vpop.f32.mrb[0].mxu0
  %615 = vdwg.mxu0
  %v616 = vadd.f32 %v69, %v418
  %v617 = vadd.f32 %v70, %v421
  %v618 = vadd.f32 %v71, %v426
  %v619 = vadd.f32 %v72, %v429
  %v620 = vadd.f32 %v73, %v434
  %v621 = vadd.f32 %v74, %v437
  %v622 = vadd.f32 %v75, %v442
  %v623 = vadd.f32 %v76, %v445
  %v624 = vadd.f32 %v77, %v450
  %v625 = vadd.f32 %v78, %v453
  %v626 = vadd.f32 %v79, %v458
  %v627 = vadd.f32 %v80, %v461
  %v628 = vadd.f32 %v81, %v466
  %v629 = vadd.f32 %v82, %v469
  %v630 = vadd.f32 %v83, %v474
  %v631 = vadd.f32 %v84, %v477
  %v632 = vadd.f32 %v85, %v482
  %v633 = vadd.f32 %v86, %v485
  %v634 = vadd.f32 %v87, %v490
  %v635 = vadd.f32 %v88, %v493
  %v636 = vadd.f32 %v89, %v498
  %v637 = vadd.f32 %v90, %v501
  %v638 = vadd.f32 %v91, %v506
  %v639 = vadd.f32 %v92, %v509
  %v640 = vadd.f32 %v93, %v514
  %v641 = vadd.f32 %v94, %v517
  %v642 = vadd.f32 %v95, %v522
  %v643 = vadd.f32 %v96, %v525
  %v644 = vadd.f32 %v97, %v530
  %v645 = vadd.f32 %v98, %v533
  %v646 = vadd.f32 %v99, %v538
  %v647 = vadd.f32 %v100, %v541
  %v648 = vadd.f32 %v101, %v546
  %v649 = vadd.f32 %v102, %v549
  %v650 = vadd.f32 %v103, %v554
  %v651 = vadd.f32 %v104, %v557
  %v652 = vadd.f32 %v105, %v562
  %v653 = vadd.f32 %v106, %v565
  %v654 = vadd.f32 %v107, %v570
  %v655 = vadd.f32 %v108, %v573
  %v656 = vadd.f32 %v109, %v578
  %v657 = vadd.f32 %v110, %v581
  %v658 = vadd.f32 %v111, %v586
  %v659 = vadd.f32 %v112, %v589
  %v660 = vadd.f32 %v113, %v594
  %v661 = vadd.f32 %v114, %v597
  %v662 = vadd.f32 %v115, %v602
  %v663 = vadd.f32 %v116, %v605
  %v664 = vadd.f32 %v117, %v610
  %v665 = vadd.f32 %v118, %v613
  %666 = vst [vmem:[#allocation2] sm:$0xff] %v616
  %667 = vst [vmem:[#allocation2 + $0x8] sm:$0xff] %v617
  %668 = vst [vmem:[#allocation2 + $0x10] sm:$0xff] %v618
  %669 = vst [vmem:[#allocation2 + $0x18] sm:$0xff] %v619
  %670 = vst [vmem:[#allocation2 + $0x20] sm:$0xff] %v620
  %671 = vst [vmem:[#allocation2 + $0x28] sm:$0xff] %v621
  %672 = vst [vmem:[#allocation2 + $0x30] sm:$0xff] %v622
  %673 = vst [vmem:[#allocation2 + $0x38] sm:$0xff] %v623
  %674 = vst [vmem:[#allocation2 + $0x40] sm:$0xff] %v624
  %675 = vst [vmem:[#allocation2 + $0x48] sm:$0xff] %v625
  %676 = vst [vmem:[#allocation2 + $0x50] sm:$0xff] %v626
  %677 = vst [vmem:[#allocation2 + $0x58] sm:$0xff] %v627
  %678 = vst [vmem:[#allocation2 + $0x60] sm:$0xff] %v628
  %679 = vst [vmem:[#allocation2 + $0x68] sm:$0xff] %v629
  %680 = vst [vmem:[#allocation2 + $0x70] sm:$0xff] %v630
  %681 = vst [vmem:[#allocation2 + $0x78] sm:$0xff] %v631
  %682 = vst [vmem:[#allocation2 + $0x80] sm:$0xff] %v632
  %683 = vst [vmem:[#allocation2 + $0x88] sm:$0xff] %v633
  %684 = vst [vmem:[#allocation2 + $0x90] sm:$0xff] %v634
  %685 = vst [vmem:[#allocation2 + $0x98] sm:$0xff] %v635
  %686 = vst [vmem:[#allocation2 + $0xa0] sm:$0xff] %v636
  %687 = vst [vmem:[#allocation2 + $0xa8] sm:$0xff] %v637
  %688 = vst [vmem:[#allocation2 + $0xb0] sm:$0xff] %v638
  %689 = vst [vmem:[#allocation2 + $0xb8] sm:$0xff] %v639
  %690 = vst [vmem:[#allocation2 + $0xc0] sm:$0xff] %v640
  %691 = vst [vmem:[#allocation2 + $0xc8] sm:$0xff] %v641
  %692 = vst [vmem:[#allocation2 + $0xd0] sm:$0xff] %v642
  %693 = vst [vmem:[#allocation2 + $0xd8] sm:$0xff] %v643
  %694 = vst [vmem:[#allocation2 + $0xe0] sm:$0xff] %v644
  %695 = vst [vmem:[#allocation2 + $0xe8] sm:$0xff] %v645
  %696 = vst [vmem:[#allocation2 + $0xf0] sm:$0xff] %v646
  %697 = vst [vmem:[#allocation2 + $0xf8] sm:$0xff] %v647
  %698 = vst [vmem:[#allocation2 + $0x100] sm:$0xff] %v648
  %699 = vst [vmem:[#allocation2 + $0x108] sm:$0xff] %v649
  %700 = vst [vmem:[#allocation2 + $0x110] sm:$0xff] %v650
  %701 = vst [vmem:[#allocation2 + $0x118] sm:$0xff] %v651
  %702 = vst [vmem:[#allocation2 + $0x120] sm:$0xff] %v652
  %703 = vst [vmem:[#allocation2 + $0x128] sm:$0xff] %v653
  %704 = vst [vmem:[#allocation2 + $0x130] sm:$0xff] %v654
  %705 = vst [vmem:[#allocation2 + $0x138] sm:$0xff] %v655
  %706 = vst [vmem:[#allocation2 + $0x140] sm:$0xff] %v656
  %707 = vst [vmem:[#allocation2 + $0x148] sm:$0xff] %v657
  %708 = vst [vmem:[#allocation2 + $0x150] sm:$0xff] %v658
  %709 = vst [vmem:[#allocation2 + $0x158] sm:$0xff] %v659
  %710 = vst [vmem:[#allocation2 + $0x160] sm:$0xff] %v660
  %711 = vst [vmem:[#allocation2 + $0x168] sm:$0xff] %v661
  %712 = vst [vmem:[#allocation2 + $0x170] sm:$0xff] %v662
  %713 = vst [vmem:[#allocation2 + $0x178] sm:$0xff] %v663
  %714 = vst [vmem:[#allocation2 + $0x180] sm:$0xff] %v664
  %715 = vst [vmem:[#allocation2 + $0x188] sm:$0xff] %v665
  // Predicated region
  $region14: #{_forward.2} parent=0 // pred_check
    %p716 = pneg %p15
  $region15: #{_forward.2} parent=0 // pred_check_branch
    %718 = sbr.rel (%p716) target = $region17
  $region16: #{_forward.2} parent=0 // pred_region
    %v719 = vld [vmem:[#allocation2] sm:$0xff]
    %v720 = vld [vmem:[#allocation2 + $0x8] sm:$0xff]
    %v721 = vld [vmem:[#allocation2 + $0x10] sm:$0xff]
    %v722 = vld [vmem:[#allocation2 + $0x18] sm:$0xff]
    %v723 = vld [vmem:[#allocation2 + $0x20] sm:$0xff]
    %v724 = vld [vmem:[#allocation2 + $0x28] sm:$0xff]
    %v725 = vld [vmem:[#allocation2 + $0x30] sm:$0xff]
    %v726 = vld [vmem:[#allocation2 + $0x38] sm:$0xff]
    %v727 = vld [vmem:[#allocation2 + $0x40] sm:$0xff]
    %v728 = vld [vmem:[#allocation2 + $0x48] sm:$0xff]
    %v729 = vld [vmem:[#allocation2 + $0x50] sm:$0xff]
    %v730 = vld [vmem:[#allocation2 + $0x58] sm:$0xff]
    %v731 = vld [vmem:[#allocation2 + $0x60] sm:$0xff]
    %v732 = vld [vmem:[#allocation2 + $0x68] sm:$0xff]
    %v733 = vld [vmem:[#allocation2 + $0x70] sm:$0xff]
    %v734 = vld [vmem:[#allocation2 + $0x78] sm:$0xff]
    %v735 = vld [vmem:[#allocation2 + $0x80] sm:$0xff]
    %v736 = vld [vmem:[#allocation2 + $0x88] sm:$0xff]
    %v737 = vld [vmem:[#allocation2 + $0x90] sm:$0xff]
    %v738 = vld [vmem:[#allocation2 + $0x98] sm:$0xff]
    %v739 = vld [vmem:[#allocation2 + $0xa0] sm:$0xff]
    %v740 = vld [vmem:[#allocation2 + $0xa8] sm:$0xff]
    %v741 = vld [vmem:[#allocation2 + $0xb0] sm:$0xff]
    %v742 = vld [vmem:[#allocation2 + $0xb8] sm:$0xff]
    %v743 = vld [vmem:[#allocation2 + $0xc0] sm:$0xff]
    %v744 = vld [vmem:[#allocation2 + $0xc8] sm:$0xff]
    %v745 = vld [vmem:[#allocation2 + $0xd0] sm:$0xff]
    %v746 = vld [vmem:[#allocation2 + $0xd8] sm:$0xff]
    %v747 = vld [vmem:[#allocation2 + $0xe0] sm:$0xff]
    %v748 = vld [vmem:[#allocation2 + $0xe8] sm:$0xff]
    %v749 = vld [vmem:[#allocation2 + $0xf0] sm:$0xff]
    %v750 = vld [vmem:[#allocation2 + $0xf8] sm:$0xff]
    %v751 = vld [vmem:[#allocation2 + $0x100] sm:$0xff]
    %v752 = vld [vmem:[#allocation2 + $0x108] sm:$0xff]
    %v753 = vld [vmem:[#allocation2 + $0x110] sm:$0xff]
    %v754 = vld [vmem:[#allocation2 + $0x118] sm:$0xff]
    %v755 = vld [vmem:[#allocation2 + $0x120] sm:$0xff]
    %v756 = vld [vmem:[#allocation2 + $0x128] sm:$0xff]
    %v757 = vld [vmem:[#allocation2 + $0x130] sm:$0xff]
    %v758 = vld [vmem:[#allocation2 + $0x138] sm:$0xff]
    %v759 = vld [vmem:[#allocation2 + $0x140] sm:$0xff]
    %v760 = vld [vmem:[#allocation2 + $0x148] sm:$0xff]
    %v761 = vld [vmem:[#allocation2 + $0x150] sm:$0xff]
    %v762 = vld [vmem:[#allocation2 + $0x158] sm:$0xff]
    %v763 = vld [vmem:[#allocation2 + $0x160] sm:$0xff]
    %v764 = vld [vmem:[#allocation2 + $0x168] sm:$0xff]
    %v765 = vld [vmem:[#allocation2 + $0x170] sm:$0xff]
    %v766 = vld [vmem:[#allocation2 + $0x178] sm:$0xff]
    %v767 = vld [vmem:[#allocation2 + $0x180] sm:$0xff]
    %v768 = vld [vmem:[#allocation2 + $0x188] sm:$0xff]
    %v769 = vpack.c.bf16 %v720, %v719
    %v770 = vpack.c.bf16 %v722, %v721
    %v771 = vpack.c.bf16 %v724, %v723
    %v772 = vpack.c.bf16 %v726, %v725
    %v773 = vpack.c.bf16 %v728, %v727
    %v774 = vpack.c.bf16 %v730, %v729
    %v775 = vpack.c.bf16 %v732, %v731
    %v776 = vpack.c.bf16 %v734, %v733
    %v777 = vpack.c.bf16 %v736, %v735
    %v778 = vpack.c.bf16 %v738, %v737
    %v779 = vpack.c.bf16 %v740, %v739
    %v780 = vpack.c.bf16 %v742, %v741
    %v781 = vpack.c.bf16 %v744, %v743
    %v782 = vpack.c.bf16 %v746, %v745
    %v783 = vpack.c.bf16 %v748, %v747
    %v784 = vpack.c.bf16 %v750, %v749
    %v785 = vpack.c.bf16 %v752, %v751
    %v786 = vpack.c.bf16 %v754, %v753
    %v787 = vpack.c.bf16 %v756, %v755
    %v788 = vpack.c.bf16 %v758, %v757
    %v789 = vpack.c.bf16 %v760, %v759
    %v790 = vpack.c.bf16 %v762, %v761
    %v791 = vpack.c.bf16 %v764, %v763
    %v792 = vpack.c.bf16 %v766, %v765
    %v793 = vpack.c.bf16 %v768, %v767
    %v819 = vunpack.c.l.b16 %v769
    %v820 = vunpack.c.h.b16 %v769
    %v821 = vunpack.c.l.b16 %v770
    %v822 = vunpack.c.h.b16 %v770
    %v823 = vunpack.c.l.b16 %v771
    %v824 = vunpack.c.h.b16 %v771
    %v825 = vunpack.c.l.b16 %v772
    %v826 = vunpack.c.h.b16 %v772
    %v827 = vunpack.c.l.b16 %v773
    %v828 = vunpack.c.h.b16 %v773
    %v829 = vunpack.c.l.b16 %v774
    %v830 = vunpack.c.h.b16 %v774
    %v831 = vunpack.c.l.b16 %v775
    %v832 = vunpack.c.h.b16 %v775
    %v833 = vunpack.c.l.b16 %v776
    %v834 = vunpack.c.h.b16 %v776
    %v835 = vunpack.c.l.b16 %v777
    %v836 = vunpack.c.h.b16 %v777
    %v837 = vunpack.c.l.b16 %v778
    %v838 = vunpack.c.h.b16 %v778
    %v839 = vunpack.c.l.b16 %v779
    %v840 = vunpack.c.h.b16 %v779
    %v841 = vunpack.c.l.b16 %v780
    %v842 = vunpack.c.h.b16 %v780
    %v843 = vunpack.c.l.b16 %v781
    %v844 = vunpack.c.h.b16 %v781
    %v845 = vunpack.c.l.b16 %v782
    %v846 = vunpack.c.h.b16 %v782
    %v847 = vunpack.c.l.b16 %v783
    %v848 = vunpack.c.h.b16 %v783
    %v849 = vunpack.c.l.b16 %v784
    %v850 = vunpack.c.h.b16 %v784
    %v851 = vunpack.c.l.b16 %v785
    %v852 = vunpack.c.h.b16 %v785
    %v853 = vunpack.c.l.b16 %v786
    %v854 = vunpack.c.h.b16 %v786
    %v855 = vunpack.c.l.b16 %v787
    %v856 = vunpack.c.h.b16 %v787
    %v857 = vunpack.c.l.b16 %v788
    %v858 = vunpack.c.h.b16 %v788
    %v859 = vunpack.c.l.b16 %v789
    %v860 = vunpack.c.h.b16 %v789
    %v861 = vunpack.c.l.b16 %v790
    %v862 = vunpack.c.h.b16 %v790
    %v863 = vunpack.c.l.b16 %v791
    %v864 = vunpack.c.h.b16 %v791
    %v865 = vunpack.c.l.b16 %v792
    %v866 = vunpack.c.h.b16 %v792
    %v867 = vunpack.c.l.b16 %v793
    %v868 = vunpack.c.h.b16 %v793
    %v869 = vpack.c.b16 %v819, %v819
    %v870 = vpack.c.b16 %v820, %v820
    %v871 = vpack.c.b16 %v821, %v821
    %v872 = vpack.c.b16 %v822, %v822
    %v873 = vpack.c.b16 %v823, %v823
    %v874 = vpack.c.b16 %v824, %v824
    %v875 = vpack.c.b16 %v825, %v825
    %v876 = vpack.c.b16 %v826, %v826
    %v877 = vpack.c.b16 %v827, %v827
    %v878 = vpack.c.b16 %v828, %v828
    %v879 = vpack.c.b16 %v829, %v829
    %v880 = vpack.c.b16 %v830, %v830
    %v881 = vpack.c.b16 %v831, %v831
    %v882 = vpack.c.b16 %v832, %v832
    %v883 = vpack.c.b16 %v833, %v833
    %v884 = vpack.c.b16 %v834, %v834
    %v885 = vpack.c.b16 %v835, %v835
    %v886 = vpack.c.b16 %v836, %v836
    %v887 = vpack.c.b16 %v837, %v837
    %v888 = vpack.c.b16 %v838, %v838
    %v889 = vpack.c.b16 %v839, %v839
    %v890 = vpack.c.b16 %v840, %v840
    %v891 = vpack.c.b16 %v841, %v841
    %v892 = vpack.c.b16 %v842, %v842
    %v893 = vpack.c.b16 %v843, %v843
    %v894 = vpack.c.b16 %v844, %v844
    %v895 = vpack.c.b16 %v845, %v845
    %v896 = vpack.c.b16 %v846, %v846
    %v897 = vpack.c.b16 %v847, %v847
    %v898 = vpack.c.b16 %v848, %v848
    %v899 = vpack.c.b16 %v849, %v849
    %v900 = vpack.c.b16 %v850, %v850
    %v901 = vpack.c.b16 %v851, %v851
    %v902 = vpack.c.b16 %v852, %v852
    %v903 = vpack.c.b16 %v853, %v853
    %v904 = vpack.c.b16 %v854, %v854
    %v905 = vpack.c.b16 %v855, %v855
    %v906 = vpack.c.b16 %v856, %v856
    %v907 = vpack.c.b16 %v857, %v857
    %v908 = vpack.c.b16 %v858, %v858
    %v909 = vpack.c.b16 %v859, %v859
    %v910 = vpack.c.b16 %v860, %v860
    %v911 = vpack.c.b16 %v861, %v861
    %v912 = vpack.c.b16 %v862, %v862
    %v913 = vpack.c.b16 %v863, %v863
    %v914 = vpack.c.b16 %v864, %v864
    %v915 = vpack.c.b16 %v865, %v865
    %v916 = vpack.c.b16 %v866, %v866
    %v917 = vpack.c.b16 %v867, %v867
    %v918 = vpack.c.b16 %v868, %v868
    %969 = vst [vmem:[%s2] sm:$0xf] %v869
    %970 = vst [vmem:[%s2 + $0x4] sm:$0xf] %v870
    %971 = vst [vmem:[%s2 + $0x8] sm:$0xf] %v871
    %972 = vst [vmem:[%s2 + $0xc] sm:$0xf] %v872
    %973 = vst [vmem:[%s2 + $0x10] sm:$0xf] %v873
    %974 = vst [vmem:[%s2 + $0x14] sm:$0xf] %v874
    %975 = vst [vmem:[%s2 + $0x18] sm:$0xf] %v875
    %976 = vst [vmem:[%s2 + $0x1c] sm:$0xf] %v876
    %977 = vst [vmem:[%s2 + $0x20] sm:$0xf] %v877
    %978 = vst [vmem:[%s2 + $0x24] sm:$0xf] %v878
    %979 = vst [vmem:[%s2 + $0x28] sm:$0xf] %v879
    %980 = vst [vmem:[%s2 + $0x2c] sm:$0xf] %v880
    %981 = vst [vmem:[%s2 + $0x30] sm:$0xf] %v881
    %982 = vst [vmem:[%s2 + $0x34] sm:$0xf] %v882
    %983 = vst [vmem:[%s2 + $0x38] sm:$0xf] %v883
    %984 = vst [vmem:[%s2 + $0x3c] sm:$0xf] %v884
    %985 = vst [vmem:[%s2 + $0x40] sm:$0xf] %v885
    %986 = vst [vmem:[%s2 + $0x44] sm:$0xf] %v886
    %987 = vst [vmem:[%s2 + $0x48] sm:$0xf] %v887
    %988 = vst [vmem:[%s2 + $0x4c] sm:$0xf] %v888
    %989 = vst [vmem:[%s2 + $0x50] sm:$0xf] %v889
    %990 = vst [vmem:[%s2 + $0x54] sm:$0xf] %v890
    %991 = vst [vmem:[%s2 + $0x58] sm:$0xf] %v891
    %992 = vst [vmem:[%s2 + $0x5c] sm:$0xf] %v892
    %993 = vst [vmem:[%s2 + $0x60] sm:$0xf] %v893
    %994 = vst [vmem:[%s2 + $0x64] sm:$0xf] %v894
    %995 = vst [vmem:[%s2 + $0x68] sm:$0xf] %v895
    %996 = vst [vmem:[%s2 + $0x6c] sm:$0xf] %v896
    %997 = vst [vmem:[%s2 + $0x70] sm:$0xf] %v897
    %998 = vst [vmem:[%s2 + $0x74] sm:$0xf] %v898
    %999 = vst [vmem:[%s2 + $0x78] sm:$0xf] %v899
    %1000 = vst [vmem:[%s2 + $0x7c] sm:$0xf] %v900
    %1001 = vst [vmem:[%s2 + $0x80] sm:$0xf] %v901
    %1002 = vst [vmem:[%s2 + $0x84] sm:$0xf] %v902
    %1003 = vst [vmem:[%s2 + $0x88] sm:$0xf] %v903
    %1004 = vst [vmem:[%s2 + $0x8c] sm:$0xf] %v904
    %1005 = vst [vmem:[%s2 + $0x90] sm:$0xf] %v905
    %1006 = vst [vmem:[%s2 + $0x94] sm:$0xf] %v906
    %1007 = vst [vmem:[%s2 + $0x98] sm:$0xf] %v907
    %1008 = vst [vmem:[%s2 + $0x9c] sm:$0xf] %v908
    %1009 = vst [vmem:[%s2 + $0xa0] sm:$0xf] %v909
    %1010 = vst [vmem:[%s2 + $0xa4] sm:$0xf] %v910
    %1011 = vst [vmem:[%s2 + $0xa8] sm:$0xf] %v911
    %1012 = vst [vmem:[%s2 + $0xac] sm:$0xf] %v912
    %1013 = vst [vmem:[%s2 + $0xb0] sm:$0xf] %v913
    %1014 = vst [vmem:[%s2 + $0xb4] sm:$0xf] %v914
    %1015 = vst [vmem:[%s2 + $0xb8] sm:$0xf] %v915
    %1016 = vst [vmem:[%s2 + $0xbc] sm:$0xf] %v916
    %1017 = vst [vmem:[%s2 + $0xc0] sm:$0xf] %v917
    %1018 = vst [vmem:[%s2 + $0xc4] sm:$0xf] %v918
    %v1019 = vadd.f32 %v719, %v720
    %v1020 = vadd.f32 %v1019, %v721
    %v1021 = vadd.f32 %v1020, %v722
    %v1022 = vadd.f32 %v1021, %v723
    %v1023 = vadd.f32 %v1022, %v724
    %v1024 = vadd.f32 %v1023, %v725
    %v1025 = vadd.f32 %v1024, %v726
    %v1026 = vadd.f32 %v1025, %v727
    %v1027 = vadd.f32 %v1026, %v728
    %v1028 = vadd.f32 %v1027, %v729
    %v1029 = vadd.f32 %v1028, %v730
    %v1030 = vadd.f32 %v1029, %v731
    %v1031 = vadd.f32 %v1030, %v732
    %v1032 = vadd.f32 %v1031, %v733
    %v1033 = vadd.f32 %v1032, %v734
    %v1034 = vadd.f32 %v1033, %v735
    %v1035 = vadd.f32 %v1034, %v736
    %v1036 = vadd.f32 %v1035, %v737
    %v1037 = vadd.f32 %v1036, %v738
    %v1038 = vadd.f32 %v1037, %v739
    %v1039 = vadd.f32 %v1038, %v740
    %v1040 = vadd.f32 %v1039, %v741
    %v1041 = vadd.f32 %v1040, %v742
    %v1042 = vadd.f32 %v1041, %v743
    %v1043 = vadd.f32 %v1042, %v744
    %v1044 = vadd.f32 %v1043, %v745
    %v1045 = vadd.f32 %v1044, %v746
    %v1046 = vadd.f32 %v1045, %v747
    %v1047 = vadd.f32 %v1046, %v748
    %v1048 = vadd.f32 %v1047, %v749
    %v1049 = vadd.f32 %v1048, %v750
    %v1050 = vadd.f32 %v1049, %v751
    %v1051 = vadd.f32 %v1050, %v752
    %v1052 = vadd.f32 %v1051, %v753
    %v1053 = vadd.f32 %v1052, %v754
    %v1054 = vadd.f32 %v1053, %v755
    %v1055 = vadd.f32 %v1054, %v756
    %v1056 = vadd.f32 %v1055, %v757
    %v1057 = vadd.f32 %v1056, %v758
    %v1058 = vadd.f32 %v1057, %v759
    %v1059 = vadd.f32 %v1058, %v760
    %v1060 = vadd.f32 %v1059, %v761
    %v1061 = vadd.f32 %v1060, %v762
    %v1062 = vadd.f32 %v1061, %v763
    %v1063 = vadd.f32 %v1062, %v764
    %v1064 = vadd.f32 %v1063, %v765
    %v1065 = vadd.f32 %v1064, %v766
    %v1066 = vadd.f32 %v1065, %v767
    %v1067 = vadd.f32 %v1066, %v768
    %v1068 = vrot.slane %v1067, 4
    %v1069 = vadd.f32 %v1067, %v1068
    %v1070 = vrot.slane %v1069, 2
    %v1071 = vadd.f32 %v1069, %v1070
    %v1072 = vrot.slane %v1071, 1
    %v1073 = vadd.f32 %v1071, %v1072
    %1074 = vst [vmem:[%s3] sm:$0x1] %v1073
    %v1075 = vmul.f32 %v719, %v719
    %v1076 = vmul.f32 %v720, %v720
    %v1077 = vmul.f32 %v721, %v721
    %v1078 = vmul.f32 %v722, %v722
    %v1079 = vmul.f32 %v723, %v723
    %v1080 = vmul.f32 %v724, %v724
    %v1081 = vmul.f32 %v725, %v725
    %v1082 = vmul.f32 %v726, %v726
    %v1083 = vmul.f32 %v727, %v727
    %v1084 = vmul.f32 %v728, %v728
    %v1085 = vmul.f32 %v729, %v729
    %v1086 = vmul.f32 %v730, %v730
    %v1087 = vmul.f32 %v731, %v731
    %v1088 = vmul.f32 %v732, %v732
    %v1089 = vmul.f32 %v733, %v733
    %v1090 = vmul.f32 %v734, %v734
    %v1091 = vmul.f32 %v735, %v735
    %v1092 = vmul.f32 %v736, %v736
    %v1093 = vmul.f32 %v737, %v737
    %v1094 = vmul.f32 %v738, %v738
    %v1095 = vmul.f32 %v739, %v739
    %v1096 = vmul.f32 %v740, %v740
    %v1097 = vmul.f32 %v741, %v741
    %v1098 = vmul.f32 %v742, %v742
    %v1099 = vmul.f32 %v743, %v743
    %v1100 = vmul.f32 %v744, %v744
    %v1101 = vmul.f32 %v745, %v745
    %v1102 = vmul.f32 %v746, %v746
    %v1103 = vmul.f32 %v747, %v747
    %v1104 = vmul.f32 %v748, %v748
    %v1105 = vmul.f32 %v749, %v749
    %v1106 = vmul.f32 %v750, %v750
    %v1107 = vmul.f32 %v751, %v751
    %v1108 = vmul.f32 %v752, %v752
    %v1109 = vmul.f32 %v753, %v753
    %v1110 = vmul.f32 %v754, %v754
    %v1111 = vmul.f32 %v755, %v755
    %v1112 = vmul.f32 %v756, %v756
    %v1113 = vmul.f32 %v757, %v757
    %v1114 = vmul.f32 %v758, %v758
    %v1115 = vmul.f32 %v759, %v759
    %v1116 = vmul.f32 %v760, %v760
    %v1117 = vmul.f32 %v761, %v761
    %v1118 = vmul.f32 %v762, %v762
    %v1119 = vmul.f32 %v763, %v763
    %v1120 = vmul.f32 %v764, %v764
    %v1121 = vmul.f32 %v765, %v765
    %v1122 = vmul.f32 %v766, %v766
    %v1123 = vmul.f32 %v767, %v767
    %v1124 = vmul.f32 %v768, %v768
    %v1125 = vadd.f32 %v1075, %v1076
    %v1126 = vadd.f32 %v1125, %v1077
    %v1127 = vadd.f32 %v1126, %v1078
    %v1128 = vadd.f32 %v1127, %v1079
    %v1129 = vadd.f32 %v1128, %v1080
    %v1130 = vadd.f32 %v1129, %v1081
    %v1131 = vadd.f32 %v1130, %v1082
    %v1132 = vadd.f32 %v1131, %v1083
    %v1133 = vadd.f32 %v1132, %v1084
    %v1134 = vadd.f32 %v1133, %v1085
    %v1135 = vadd.f32 %v1134, %v1086
    %v1136 = vadd.f32 %v1135, %v1087
    %v1137 = vadd.f32 %v1136, %v1088
    %v1138 = vadd.f32 %v1137, %v1089
    %v1139 = vadd.f32 %v1138, %v1090
    %v1140 = vadd.f32 %v1139, %v1091
    %v1141 = vadd.f32 %v1140, %v1092
    %v1142 = vadd.f32 %v1141, %v1093
    %v1143 = vadd.f32 %v1142, %v1094
    %v1144 = vadd.f32 %v1143, %v1095
    %v1145 = vadd.f32 %v1144, %v1096
    %v1146 = vadd.f32 %v1145, %v1097
    %v1147 = vadd.f32 %v1146, %v1098
    %v1148 = vadd.f32 %v1147, %v1099
    %v1149 = vadd.f32 %v1148, %v1100
    %v1150 = vadd.f32 %v1149, %v1101
    %v1151 = vadd.f32 %v1150, %v1102
    %v1152 = vadd.f32 %v1151, %v1103
    %v1153 = vadd.f32 %v1152, %v1104
    %v1154 = vadd.f32 %v1153, %v1105
    %v1155 = vadd.f32 %v1154, %v1106
    %v1156 = vadd.f32 %v1155, %v1107
    %v1157 = vadd.f32 %v1156, %v1108
    %v1158 = vadd.f32 %v1157, %v1109
    %v1159 = vadd.f32 %v1158, %v1110
    %v1160 = vadd.f32 %v1159, %v1111
    %v1161 = vadd.f32 %v1160, %v1112
    %v1162 = vadd.f32 %v1161, %v1113
    %v1163 = vadd.f32 %v1162, %v1114
    %v1164 = vadd.f32 %v1163, %v1115
    %v1165 = vadd.f32 %v1164, %v1116
    %v1166 = vadd.f32 %v1165, %v1117
    %v1167 = vadd.f32 %v1166, %v1118
    %v1168 = vadd.f32 %v1167, %v1119
    %v1169 = vadd.f32 %v1168, %v1120
    %v1170 = vadd.f32 %v1169, %v1121
    %v1171 = vadd.f32 %v1170, %v1122
    %v1172 = vadd.f32 %v1171, %v1123
    %v1173 = vadd.f32 %v1172, %v1124
    %v1174 = vrot.slane %v1173, 4
    %v1175 = vadd.f32 %v1173, %v1174
    %v1176 = vrot.slane %v1175, 2
    %v1177 = vadd.f32 %v1175, %v1176
    %v1178 = vrot.slane %v1177, 1
    %v1179 = vadd.f32 %v1177, %v1178
    %1180 = vst [vmem:[%s4] sm:$0x1] %v1179
  $region17: #{_forward.2} parent=0 // pred_fallthru
    _
  // Predicated region
  $region18: #{_forward.2} parent=0 // pred_check
    _
  $region19: #{_forward.2} parent=0 // pred_check_branch
    %1182 = sbr.rel (0) target = $region21
  $region20: #{_forward.2} parent=0 // pred_region
    _
  $region21: #{_forward.2} parent=0 // pred_fallthru
    _
  // Predicated region
  $region22: #{_forward.2} parent=0 // pred_check
    _
  $region23: #{_forward.2} parent=0 // pred_check_branch
    %1184 = sbr.rel (0) target = $region25
  $region24: #{_forward.2} parent=0 // pred_region
    _
  $region25: #{_forward.2} parent=0 // pred_fallthru
    _
  // Predicated region
  $region26: #{_forward.2} parent=0 // pred_check
    _
  $region27: #{_forward.2} parent=0 // pred_check_branch
    %1186 = sbr.rel (0) target = $region29
  $region28: #{_forward.2} parent=0 // pred_region
    _
  $region29: #{_forward.2} parent=0 // pred_fallthru
    _
  // Predicated region
  $region30: #{_forward.2} parent=0 // pred_check
    _
  $region31: #{_forward.2} parent=0 // pred_check_branch
    %1188 = sbr.rel (0) target = $region33
  $region32: #{_forward.2} parent=0 // pred_region
    _
  $region33: #{_forward.2} parent=0 // pred_fallthru
    _
  // Predicated region
  $region34: #{_forward.2} parent=0 // pred_check
    _
  $region35: #{_forward.2} parent=0 // pred_check_branch
    %1190 = sbr.rel (0) target = $region37
  $region36: #{_forward.2} parent=0 // pred_region
    _
  $region37: #{_forward.2} parent=0 // pred_fallthru
    _
  // Predicated region
  $region38: #{_forward.2} parent=0 // pred_check
    _
  $region39: #{_forward.2} parent=0 // pred_check_branch
    %1192 = sbr.rel (0) target = $region41
  $region40: #{_forward.2} parent=0 // pred_region
    _
  $region41: #{_forward.2} parent=0 // pred_fallthru
    _

</llo_original>
